<compile_context>
chip_gen: v6e
topology: v6e:2x2x1
jax: 0.10.0
libtpu: 0.0.40
codegen_flags: <defaults>
</compile_context>

<pallas_src>
import functools

import jax
import jax.numpy as jnp
from jax.experimental import pallas as pl
from jax.experimental.pallas import tpu as pltpu


FPC = 16  # features per chain in the step stream: 10 base + h + h*b2c + h*b2r + 3 pad (8-aligned)


def _aging_kernel(step_ref, cr0_ref, w_ref, out_ref, cr_ref, *, tsteps, nchains, unroll):
    """One (batch-tile, time-tile) of the Euler recurrence over the [C, R] state.

    step_ref : (T, nchains*16, bt) f32  per chain ch: rows ch*16+0..9 = base_i,
                                        row ch*16+10 = h_i, +11 = h_i*b2_C, +12 = h_i*b2_R
    cr0_ref  : (2*nchains, bt) f32      rows 2*ch = C_0, 2*ch+1 = R_0
    w_ref    : (10, 4) f32              columns = [W1[C,:], W1[R,:], W2[:,C], W2[:,R]]
    out_ref  : (T, 2*nchains, bt) f32   rows ch = C_i, nchains+ch = R_i   (feature-major)
    cr_ref   : (2*nchains, bt) f32 VMEM scratch carrying the state across time tiles
    """
    # New batch tile -> (re)load the initial state.  Time is grid axis 1 ("arbitrary").
    @pl.when(pl.program_id(1) == 0)
    def _():
        cr_ref[...] = cr0_ref[...]

    bt = step_ref.shape[-1]
    # Loop-invariant lane-broadcasts of the weight columns, hoisted out of the recurrence
    # (broadcast_in_dim is not CSE'd, so do it once here, not per step).
    w1c = jnp.broadcast_to(w_ref[:, 0:1], (10, bt))
    w1r = jnp.broadcast_to(w_ref[:, 1:2], (10, bt))
    w2c = jnp.broadcast_to(w_ref[:, 2:3], (10, bt))
    w2r = jnp.broadcast_to(w_ref[:, 3:4], (10, bt))

    carry0 = []
    for ch in range(nchains):
        carry0.append(cr_ref[2 * ch:2 * ch + 1, :])        # C  (1, bt)
        carry0.append(cr_ref[2 * ch + 1:2 * ch + 2, :])    # R  (1, bt)

    def body(i, carry):
        new = []
        for ch in range(nchains):      # independent sub-chains -> ILP on the serial chain
            c = carry[2 * ch]
            r = carry[2 * ch + 1]
            off = ch * FPC
            base = step_ref[i, off:off + 10, :]             # (10, bt)
            h = step_ref[i, off + 10:off + 11, :]           # (1, bt)
            hb2c = step_ref[i, off + 11:off + 12, :]        # h * b2_C (precomputed)
            hb2r = step_ref[i, off + 12:off + 13, :]        # h * b2_R (precomputed)
            hidden = jnp.tanh(base + c * w1c + r * w1r)     # VPU FMAs + EUP tanh
            red_c = jnp.sum(hidden * w2c, axis=0, keepdims=True)   # XLU sublane reduce
            red_r = jnp.sum(hidden * w2r, axis=0, keepdims=True)
            c_new = (c + hb2c) + h * red_c                  # short post-reduce tail
            r_new = (r + hb2r) + h * red_r
            out_ref[i, ch:ch + 1, :] = c_new                # feature-major rows: C block ...
            out_ref[i, nchains + ch:nchains + ch + 1, :] = r_new   # ... then R block
            new.append(c_new)
            new.append(r_new)
        return tuple(new)

    final = jax.lax.fori_loop(0, tsteps, body, tuple(carry0), unroll=unroll)

    for ch in range(nchains):
        cr_ref[2 * ch:2 * ch + 1, :] = final[2 * ch]
        cr_ref[2 * ch + 1:2 * ch + 2, :] = final[2 * ch + 1]


def _ceil_to(x, m):
    return -(-x // m) * m


def neural_network_forward(throughput, DOD, V_av, C_0, R_0, n, params,
                           *, time_tile=512, unroll=8):
    """JAX/Pallas equivalent of NeuralNetwork.forward.

    throughput: (B, n+1) f32;  DOD, V_av, C_0, R_0: (1, B) f32
    returns:    (B, n+1, 2) f32 — the [C, R] trajectory (columns -2: of the torch output)
    """
    W1, b1, W2, b2 = params
    W1 = jnp.asarray(W1, jnp.float32)                # (5, 10)  (in, out): model is x @ W1 + b1
    b1 = jnp.asarray(b1, jnp.float32).reshape(-1)    # (10,)
    W2 = jnp.asarray(W2, jnp.float32)                # (10, 5)
    b2 = jnp.asarray(b2, jnp.float32).reshape(-1)    # (5,)
    throughput = jnp.asarray(throughput, jnp.float32)
    B = throughput.shape[0]
    assert n >= 1

    # ---- chain split (ILP on the latency-bound serial chain) and batch padding ----------
    nchains = 2 if 2 <= B <= 128 else 1
    Bc = -(-B // nchains)            # cells per chain
    Bp = nchains * Bc                # padded batch

    # ---- batch-lane tiling: 'parallel' leading grid axis (megacore-shardable on v7x) ----
    if Bc % 256 == 0:
        bt = Bc // 2                 # >= 2 tiles, each a multiple of 128 lanes
    else:
        bt = Bc                      # single tile (small / odd batches)
    nb = Bc // bt

    # ---- time tiling, capped so double-buffered in+out blocks fit comfortably in VMEM ---
    lane_bytes = _ceil_to(bt, 128) * 4
    step_bytes = (nchains * FPC + 8) * lane_bytes      # in rows + (sublane-padded) out rows
    try:
        vmem_cap = int(pltpu.get_tpu_info().vmem_capacity_bytes)
    except Exception:
        vmem_cap = 64 * 1024 * 1024                    # v7x has the smallest per-core VMEM
    budget = int(0.55 * vmem_cap)
    t_max = max(8, budget // (2 * step_bytes))         # x2: double-buffered pipeline
    T = max(1, min(time_tile, n, t_max))
    if T > 32:
        T = max(unroll, (T // unroll) * unroll)        # keep trip count a multiple of unroll
        loop_unroll = unroll
    else:
        loop_unroll = True                             # tiny tiles: fully unroll
    nt = pl.cdiv(n, T)
    n_pad = nt * T

    # ---- small per-cell precursors, padded to (n_pad, Bp).  The big stream itself is ----
    # ---- built once, directly at padded size and in its final (lane-dense) layout. ------
    pad_b = Bp - B
    pad_t = n_pad - n
    thr_prev = jnp.pad(throughput[:, :n].T, ((0, pad_t), (0, pad_b)))                   # (n_pad, Bp)
    h = jnp.pad((throughput[:, 1:n + 1] - throughput[:, :n]).T, ((0, pad_t), (0, pad_b)))
    dod = jnp.pad(jnp.asarray(DOD, jnp.float32).reshape(-1), (0, pad_b))                # (Bp,)
    vav = jnp.pad(jnp.asarray(V_av, jnp.float32).reshape(-1), (0, pad_b))
    c0 = jnp.pad(jnp.asarray(C_0, jnp.float32).reshape(-1), (0, pad_b))
    r0 = jnp.pad(jnp.asarray(R_0, jnp.float32).reshape(-1), (0, pad_b))

    thr_c = thr_prev.reshape(n_pad, nchains, Bc)
    h_c = h.reshape(n_pad, nchains, 1, Bc)

    # hidden pre-activation part that does not depend on the carried [C, R] state
    fixed = dod[:, None] * W1[1] + vav[:, None] * W1[2] + b1                            # (Bp, 10)
    fixed_c = fixed.reshape(nchains, Bc, 10).transpose(0, 2, 1)                         # (nC, 10, Bc)
    base = thr_c[:, :, None, :] * W1[0][None, None, :, None] + fixed_c[None]            # (n_pad, nC, 10, Bc)

    hb2c = h_c * b2[3]                                                                  # fold b2 into stream
    hb2r = h_c * b2[4]
    zpad = jnp.zeros((n_pad, nchains, FPC - 13, Bc), jnp.float32)
    step_in = jnp.concatenate([base, h_c, hb2c, hb2r, zpad], axis=2)                    # (n_pad, nC, 16, Bc)
    step_in = step_in.reshape(n_pad, nchains * FPC, Bc)                                 # lane-dense stream

    cr0 = (jnp.stack([c0, r0], axis=0)                                                  # (2, Bp)
           .reshape(2, nchains, Bc).transpose(1, 0, 2).reshape(2 * nchains, Bc))        # rows 2*ch + f
    w_pack = jnp.stack([W1[3], W1[4], W2[:, 3], W2[:, 4]], axis=1)                      # (10, 4)

    vmem_limit = int(min(2 * T * step_bytes + (16 << 20), int(0.95 * vmem_cap)))

    out = pl.pallas_call(
        functools.partial(_aging_kernel, tsteps=T, nchains=nchains, unroll=loop_unroll),
        out_shape=jax.ShapeDtypeStruct((n_pad, 2 * nchains, Bc), jnp.float32),
        grid=(nb, nt),
        in_specs=[
            pl.BlockSpec((T, nchains * FPC, bt), lambda b, t: (t, 0, b)),
            pl.BlockSpec((2 * nchains, bt), lambda b, t: (0, b)),
            pl.BlockSpec((10, 4), lambda b, t: (0, 0)),
        ],
        out_specs=pl.BlockSpec((T, 2 * nchains, bt), lambda b, t: (t, 0, b)),
        scratch_shapes=[pltpu.VMEM((2 * nchains, bt), jnp.float32)],
        compiler_params=pltpu.CompilerParams(
            dimension_semantics=("parallel", "arbitrary"),   # batch parallel, time carried
            vmem_limit_bytes=vmem_limit,
        ),
    )(step_in, cr0, w_pack)

    # Rows of `out` are feature-major (C block then R block), so merging (2*nC, Bc) -> (2, Bp)
    # is a free reshape; only the small returned trajectory is transposed.
    cr_hist = out.reshape(n_pad, 2, Bp)[:n, :, :B]                  # (n, 2, B)
    cr_hist = jnp.transpose(cr_hist, (2, 0, 1))                     # (B, n, 2)
    y0 = jnp.stack([c0[:B], r0[:B]], axis=-1)[:, None, :]           # (B, 1, 2) initial [C_0, R_0]
    return jnp.concatenate([y0, cr_hist], axis=1)                   # (B, n+1, 2)


def _reference_forward(throughput, DOD, V_av, C_0, R_0, n, params):
    """Pure-JAX transcription of the PyTorch forward, for verification."""
    W1, b1, W2, b2 = params
    W1 = jnp.asarray(W1, jnp.float32)
    b1 = jnp.asarray(b1, jnp.float32).reshape(1, -1)
    W2 = jnp.asarray(W2, jnp.float32)
    b2 = jnp.asarray(b2, jnp.float32).reshape(1, -1)
    init = jnp.concatenate(
        [throughput[:, 0][None, :], DOD, V_av, C_0, R_0], axis=0
    ).T.astype(jnp.float32)
    s = init
    states = [s]
    for i in range(1, n + 1):
        h = (throughput[:, i] - throughput[:, i - 1])[:, None]
        fy = jnp.tanh(s @ W1 + b1) @ W2 + b2
        t = s + h * fy
        s = jnp.concatenate(
            [throughput[:, i][:, None], init[:, 1:3], t[:, 3:5]], axis=1
        )
        states.append(s)
    y = jnp.stack(states, axis=1)  # (B, n+1, 5)
    return y[:, :, -2:]


if __name__ == "__main__":
    # High-precision matmuls for the pure-JAX reference (the Pallas kernel has no matmuls).
    jax.config.update("jax_default_matmul_precision", "highest")

    key = jax.random.PRNGKey(0)
    k_w1, k_b1, k_w2, k_b2, k_data = jax.random.split(key, 5)

    # Deterministic synthetic weights for Linear(5,10) -> Tanh -> Linear(10,5),
    # stored as (in, out) so the model computes x @ W + b.
    W1 = 0.3 * jax.random.normal(k_w1, (5, 10), jnp.float32)
    b1 = 0.1 * jax.random.normal(k_b1, (1, 10), jnp.float32)
    W2 = 0.3 * jax.random.normal(k_w2, (10, 5), jnp.float32)
    b2 = 0.1 * jax.random.normal(k_b2, (1, 5), jnp.float32)
    params = (W1, b1, W2, b2)

    # Case 1: small single-tile problem.
    # Case 2: multi-tile time grid with a ragged tail, odd batch (exercises batch padding,
    #         the 2-chain split, unroll=8 and the VMEM-carried state across time tiles).
    cases = [
        dict(B=8, n=6, time_tile=512, dthr=(0.1, 1.0)),
        dict(B=5, n=45, time_tile=40, dthr=(0.05, 0.2)),
    ]
    for idx, case in enumerate(cases):
        B, n = case["B"], case["n"]
        ks = jax.random.split(jax.random.fold_in(k_data, idx), 5)
        throughput = jnp.cumsum(
            jax.random.uniform(ks[0], (B, n + 1), jnp.float32, *case["dthr"]), axis=1
        )
        DOD = jax.random.uniform(ks[1], (1, B), jnp.float32, 0.2, 1.0)
        V_av = jax.random.uniform(ks[2], (1, B), jnp.float32, 3.2, 4.2)
        C_0 = jax.random.uniform(ks[3], (1, B), jnp.float32, 0.9, 1.1)
        R_0 = jax.random.uniform(ks[4], (1, B), jnp.float32, 0.01, 0.05)

        out = neural_network_forward(
            throughput, DOD, V_av, C_0, R_0, n, params, time_tile=case["time_tile"]
        )
        out = jax.block_until_ready(out)
        ref = _reference_forward(throughput, DOD, V_av, C_0, R_0, n, params)
        assert out.shape == (B, n + 1, 2), out.shape
        assert jnp.allclose(out, ref, rtol=1e-4, atol=1e-4), (
            f"Pallas kernel mismatch vs reference (case {idx})"
        )

    print("KERNEL_OK")
</pallas_src>

<mosaic_0001>
module attributes {stable_mosaic.version = 11 : i64} {
  func.func @_aging_kernel(%arg0: i32, %arg1: i32, %arg2: memref<6x32x4xf32, #tpu.memory_space<vmem>>, %arg3: memref<4x4xf32, #tpu.memory_space<vmem>>, %arg4: memref<10x4xf32, #tpu.memory_space<vmem>>, %arg5: memref<6x4x4xf32, #tpu.memory_space<vmem>>, %arg6: memref<4x4xf32, #tpu.memory_space<vmem>>) attributes {dimension_semantics = [#tpu.dimension_semantics<parallel>, #tpu.dimension_semantics<arbitrary>], iteration_bounds = array<i64: 1, 1>, scalar_prefetch = 0 : i64, scratch_operands = 1 : i64, tpu.core_type = #tpu.core_type<tc>, window_params = [{transform_indices = @transform_0, window_bounds = array<i64: 6, 32, 4>}, {transform_indices = @transform_1, window_bounds = array<i64: 4, 4>}, {pipeline_mode = #tpu.pipeline_mode<synchronous>, transform_indices = @transform_2, window_bounds = array<i64: 10, 4>}, {transform_indices = @transform_3, window_bounds = array<i64: 6, 4, 4>}]} {
    %c0_i32 = arith.constant 0 : i32
    %0 = arith.cmpi eq, %arg1, %c0_i32 : i32
    %1 = arith.extui %0 : i1 to i32
    %c0_i32_0 = arith.constant 0 : i32
    %2 = arith.cmpi ne, %1, %c0_i32_0 : i32
    scf.if %2 {
      %c0_182 = arith.constant 0 : index
      %c0_183 = arith.constant 0 : index
      %491 = vector.load %arg3[%c0_182, %c0_183] : memref<4x4xf32, #tpu.memory_space<vmem>>, vector<4x4xf32>
      %c0_184 = arith.constant 0 : index
      %c0_185 = arith.constant 0 : index
      %492 = vector.load %arg6[%c0_184, %c0_185] : memref<4x4xf32, #tpu.memory_space<vmem>>, vector<4x4xf32>
      tpu.vector_store %arg6[%c0_184, %c0_185], %491 {strides = array<i32>} : memref<4x4xf32, #tpu.memory_space<vmem>>, vector<4x4xf32>,
    } else {
    }
    %c0 = arith.constant 0 : index
    %c0_1 = arith.constant 0 : index
    %3 = vector.load %arg4[%c0, %c0_1] : memref<10x4xf32, #tpu.memory_space<vmem>>, vector<10x1xf32>
    %4 = vector.shape_cast %3 : vector<10x1xf32> to vector<10x1xf32>
    %5 = vector.broadcast %4 : vector<10x1xf32> to vector<10x4xf32>
    %c0_2 = arith.constant 0 : index
    %c1 = arith.constant 1 : index
    %6 = vector.load %arg4[%c0_2, %c1] : memref<10x4xf32, #tpu.memory_space<vmem>>, vector<10x1xf32>
    %7 = vector.shape_cast %6 : vector<10x1xf32> to vector<10x1xf32>
    %8 = vector.broadcast %7 : vector<10x1xf32> to vector<10x4xf32>
    %c0_3 = arith.constant 0 : index
    %c2 = arith.constant 2 : index
    %9 = vector.load %arg4[%c0_3, %c2] : memref<10x4xf32, #tpu.memory_space<vmem>>, vector<10x1xf32>
    %10 = vector.shape_cast %9 : vector<10x1xf32> to vector<10x1xf32>
    %11 = vector.broadcast %10 : vector<10x1xf32> to vector<10x4xf32>
    %c0_4 = arith.constant 0 : index
    %c3 = arith.constant 3 : index
    %12 = vector.load %arg4[%c0_4, %c3] : memref<10x4xf32, #tpu.memory_space<vmem>>, vector<10x1xf32>
    %13 = vector.shape_cast %12 : vector<10x1xf32> to vector<10x1xf32>
    %14 = vector.broadcast %13 : vector<10x1xf32> to vector<10x4xf32>
    %c0_5 = arith.constant 0 : index
    %c0_6 = arith.constant 0 : index
    %15 = vector.load %arg6[%c0_5, %c0_6] : memref<4x4xf32, #tpu.memory_space<vmem>>, vector<1x4xf32>
    %c1_7 = arith.constant 1 : index
    %c0_8 = arith.constant 0 : index
    %16 = vector.load %arg6[%c1_7, %c0_8] : memref<4x4xf32, #tpu.memory_space<vmem>>, vector<1x4xf32>
    %c2_9 = arith.constant 2 : index
    %c0_10 = arith.constant 0 : index
    %17 = vector.load %arg6[%c2_9, %c0_10] : memref<4x4xf32, #tpu.memory_space<vmem>>, vector<1x4xf32>
    %c3_11 = arith.constant 3 : index
    %c0_12 = arith.constant 0 : index
    %18 = vector.load %arg6[%c3_11, %c0_12] : memref<4x4xf32, #tpu.memory_space<vmem>>, vector<1x4xf32>
    %c0_i32_13 = arith.constant 0 : i32
    %19 = arith.index_cast %c0_i32_13 : i32 to index
    %c0_14 = arith.constant 0 : index
    %c0_15 = arith.constant 0 : index
    %20 = vector.load %arg2[%19, %c0_14, %c0_15] : memref<6x32x4xf32, #tpu.memory_space<vmem>>, vector<1x10x4xf32>
    %21 = vector.shape_cast %20 : vector<1x10x4xf32> to vector<10x4xf32>
    %22 = arith.index_cast %c0_i32_13 : i32 to index
    %c10 = arith.constant 10 : index
    %c0_16 = arith.constant 0 : index
    %23 = vector.load %arg2[%22, %c10, %c0_16] : memref<6x32x4xf32, #tpu.memory_space<vmem>>, vector<1x1x4xf32>
    %24 = vector.shape_cast %23 : vector<1x1x4xf32> to vector<1x4xf32>
    %25 = arith.index_cast %c0_i32_13 : i32 to index
    %c11 = arith.constant 11 : index
    %c0_17 = arith.constant 0 : index
    %26 = vector.load %arg2[%25, %c11, %c0_17] : memref<6x32x4xf32, #tpu.memory_space<vmem>>, vector<1x1x4xf32>
    %27 = vector.shape_cast %26 : vector<1x1x4xf32> to vector<1x4xf32>
    %28 = arith.index_cast %c0_i32_13 : i32 to index
    %c12 = arith.constant 12 : index
    %c0_18 = arith.constant 0 : index
    %29 = vector.load %arg2[%28, %c12, %c0_18] : memref<6x32x4xf32, #tpu.memory_space<vmem>>, vector<1x1x4xf32>
    %30 = vector.shape_cast %29 : vector<1x1x4xf32> to vector<1x4xf32>
    %31 = vector.broadcast %15 : vector<1x4xf32> to vector<10x4xf32>
    %32 = arith.mulf %31, %5 : vector<10x4xf32>
    %33 = arith.addf %21, %32 : vector<10x4xf32>
    %34 = vector.broadcast %16 : vector<1x4xf32> to vector<10x4xf32>
    %35 = arith.mulf %34, %8 : vector<10x4xf32>
    %36 = arith.addf %33, %35 : vector<10x4xf32>
    %37 = math.tanh %36 : vector<10x4xf32>
    %38 = arith.mulf %37, %11 : vector<10x4xf32>
    %cst = arith.constant dense<0.000000e+00> : vector<4xf32>
    %39 = vector.multi_reduction <add>, %38, %cst [0] : vector<10x4xf32> to vector<4xf32>
    %40 = vector.shape_cast %39 : vector<4xf32> to vector<1x4xf32>
    %41 = arith.mulf %37, %14 : vector<10x4xf32>
    %cst_19 = arith.constant dense<0.000000e+00> : vector<4xf32>
    %42 = vector.multi_reduction <add>, %41, %cst_19 [0] : vector<10x4xf32> to vector<4xf32>
    %43 = vector.shape_cast %42 : vector<4xf32> to vector<1x4xf32>
    %44 = arith.addf %15, %27 : vector<1x4xf32>
    %45 = arith.mulf %24, %40 : vector<1x4xf32>
    %46 = arith.addf %44, %45 : vector<1x4xf32>
    %47 = arith.addf %16, %30 : vector<1x4xf32>
    %48 = arith.mulf %24, %43 : vector<1x4xf32>
    %49 = arith.addf %47, %48 : vector<1x4xf32>
    %50 = arith.index_cast %c0_i32_13 : i32 to index
    %c0_20 = arith.constant 0 : index
    %c0_21 = arith.constant 0 : index
    %51 = vector.load %arg5[%50, %c0_20, %c0_21] : memref<6x4x4xf32, #tpu.memory_space<vmem>>, vector<1x1x4xf32>
    %52 = vector.shape_cast %51 : vector<1x1x4xf32> to vector<1x4xf32>
    %53 = vector.shape_cast %46 : vector<1x4xf32> to vector<1x1x4xf32>
    tpu.vector_store %arg5[%50, %c0_20, %c0_21], %53 {strides = array<i32>} : memref<6x4x4xf32, #tpu.memory_space<vmem>>, vector<1x1x4xf32>,
    %54 = arith.index_cast %c0_i32_13 : i32 to index
    %c2_22 = arith.constant 2 : index
    %c0_23 = arith.constant 0 : index
    %55 = vector.load %arg5[%54, %c2_22, %c0_23] : memref<6x4x4xf32, #tpu.memory_space<vmem>>, vector<1x1x4xf32>
    %56 = vector.shape_cast %55 : vector<1x1x4xf32> to vector<1x4xf32>
    %57 = vector.shape_cast %49 : vector<1x4xf32> to vector<1x1x4xf32>
    tpu.vector_store %arg5[%54, %c2_22, %c0_23], %57 {strides = array<i32>} : memref<6x4x4xf32, #tpu.memory_space<vmem>>, vector<1x1x4xf32>,
    %58 = arith.index_cast %c0_i32_13 : i32 to index
    %c16 = arith.constant 16 : index
    %c0_24 = arith.constant 0 : index
    %59 = vector.load %arg2[%58, %c16, %c0_24] : memref<6x32x4xf32, #tpu.memory_space<vmem>>, vector<1x10x4xf32>
    %60 = vector.shape_cast %59 : vector<1x10x4xf32> to vector<10x4xf32>
    %61 = arith.index_cast %c0_i32_13 : i32 to index
    %c26 = arith.constant 26 : index
    %c0_25 = arith.constant 0 : index
    %62 = vector.load %arg2[%61, %c26, %c0_25] : memref<6x32x4xf32, #tpu.memory_space<vmem>>, vector<1x1x4xf32>
    %63 = vector.shape_cast %62 : vector<1x1x4xf32> to vector<1x4xf32>
    %64 = arith.index_cast %c0_i32_13 : i32 to index
    %c27 = arith.constant 27 : index
    %c0_26 = arith.constant 0 : index
    %65 = vector.load %arg2[%64, %c27, %c0_26] : memref<6x32x4xf32, #tpu.memory_space<vmem>>, vector<1x1x4xf32>
    %66 = vector.shape_cast %65 : vector<1x1x4xf32> to vector<1x4xf32>
    %67 = arith.index_cast %c0_i32_13 : i32 to index
    %c28 = arith.constant 28 : index
    %c0_27 = arith.constant 0 : index
    %68 = vector.load %arg2[%67, %c28, %c0_27] : memref<6x32x4xf32, #tpu.memory_space<vmem>>, vector<1x1x4xf32>
    %69 = vector.shape_cast %68 : vector<1x1x4xf32> to vector<1x4xf32>
    %70 = vector.broadcast %17 : vector<1x4xf32> to vector<10x4xf32>
    %71 = arith.mulf %70, %5 : vector<10x4xf32>
    %72 = arith.addf %60, %71 : vector<10x4xf32>
    %73 = vector.broadcast %18 : vector<1x4xf32> to vector<10x4xf32>
    %74 = arith.mulf %73, %8 : vector<10x4xf32>
    %75 = arith.addf %72, %74 : vector<10x4xf32>
    %76 = math.tanh %75 : vector<10x4xf32>
    %77 = arith.mulf %76, %11 : vector<10x4xf32>
    %cst_28 = arith.constant dense<0.000000e+00> : vector<4xf32>
    %78 = vector.multi_reduction <add>, %77, %cst_28 [0] : vector<10x4xf32> to vector<4xf32>
    %79 = vector.shape_cast %78 : vector<4xf32> to vector<1x4xf32>
    %80 = arith.mulf %76, %14 : vector<10x4xf32>
    %cst_29 = arith.constant dense<0.000000e+00> : vector<4xf32>
    %81 = vector.multi_reduction <add>, %80, %cst_29 [0] : vector<10x4xf32> to vector<4xf32>
    %82 = vector.shape_cast %81 : vector<4xf32> to vector<1x4xf32>
    %83 = arith.addf %17, %66 : vector<1x4xf32>
    %84 = arith.mulf %63, %79 : vector<1x4xf32>
    %85 = arith.addf %83, %84 : vector<1x4xf32>
    %86 = arith.addf %18, %69 : vector<1x4xf32>
    %87 = arith.mulf %63, %82 : vector<1x4xf32>
    %88 = arith.addf %86, %87 : vector<1x4xf32>
    %89 = arith.index_cast %c0_i32_13 : i32 to index
    %c1_30 = arith.constant 1 : index
    %c0_31 = arith.constant 0 : index
    %90 = vector.load %arg5[%89, %c1_30, %c0_31] : memref<6x4x4xf32, #tpu.memory_space<vmem>>, vector<1x1x4xf32>
    %91 = vector.shape_cast %90 : vector<1x1x4xf32> to vector<1x4xf32>
    %92 = vector.shape_cast %85 : vector<1x4xf32> to vector<1x1x4xf32>
    tpu.vector_store %arg5[%89, %c1_30, %c0_31], %92 {strides = array<i32>} : memref<6x4x4xf32, #tpu.memory_space<vmem>>, vector<1x1x4xf32>,
    %93 = arith.index_cast %c0_i32_13 : i32 to index
    %c3_32 = arith.constant 3 : index
    %c0_33 = arith.constant 0 : index
    %94 = vector.load %arg5[%93, %c3_32, %c0_33] : memref<6x4x4xf32, #tpu.memory_space<vmem>>, vector<1x1x4xf32>
    %95 = vector.shape_cast %94 : vector<1x1x4xf32> to vector<1x4xf32>
    %96 = vector.shape_cast %88 : vector<1x4xf32> to vector<1x1x4xf32>
    tpu.vector_store %arg5[%93, %c3_32, %c0_33], %96 {strides = array<i32>} : memref<6x4x4xf32, #tpu.memory_space<vmem>>, vector<1x1x4xf32>,
    %c1_i32 = arith.constant 1 : i32
    %97 = arith.index_cast %c1_i32 : i32 to index
    %c0_34 = arith.constant 0 : index
    %c0_35 = arith.constant 0 : index
    %98 = vector.load %arg2[%97, %c0_34, %c0_35] : memref<6x32x4xf32, #tpu.memory_space<vmem>>, vector<1x10x4xf32>
    %99 = vector.shape_cast %98 : vector<1x10x4xf32> to vector<10x4xf32>
    %100 = arith.index_cast %c1_i32 : i32 to index
    %c10_36 = arith.constant 10 : index
    %c0_37 = arith.constant 0 : index
    %101 = vector.load %arg2[%100, %c10_36, %c0_37] : memref<6x32x4xf32, #tpu.memory_space<vmem>>, vector<1x1x4xf32>
    %102 = vector.shape_cast %101 : vector<1x1x4xf32> to vector<1x4xf32>
    %103 = arith.index_cast %c1_i32 : i32 to index
    %c11_38 = arith.constant 11 : index
    %c0_39 = arith.constant 0 : index
    %104 = vector.load %arg2[%103, %c11_38, %c0_39] : memref<6x32x4xf32, #tpu.memory_space<vmem>>, vector<1x1x4xf32>
    %105 = vector.shape_cast %104 : vector<1x1x4xf32> to vector<1x4xf32>
    %106 = arith.index_cast %c1_i32 : i32 to index
    %c12_40 = arith.constant 12 : index
    %c0_41 = arith.constant 0 : index
    %107 = vector.load %arg2[%106, %c12_40, %c0_41] : memref<6x32x4xf32, #tpu.memory_space<vmem>>, vector<1x1x4xf32>
    %108 = vector.shape_cast %107 : vector<1x1x4xf32> to vector<1x4xf32>
    %109 = vector.broadcast %46 : vector<1x4xf32> to vector<10x4xf32>
    %110 = arith.mulf %109, %5 : vector<10x4xf32>
    %111 = arith.addf %99, %110 : vector<10x4xf32>
    %112 = vector.broadcast %49 : vector<1x4xf32> to vector<10x4xf32>
    %113 = arith.mulf %112, %8 : vector<10x4xf32>
    %114 = arith.addf %111, %113 : vector<10x4xf32>
    %115 = math.tanh %114 : vector<10x4xf32>
    %116 = arith.mulf %115, %11 : vector<10x4xf32>
    %cst_42 = arith.constant dense<0.000000e+00> : vector<4xf32>
    %117 = vector.multi_reduction <add>, %116, %cst_42 [0] : vector<10x4xf32> to vector<4xf32>
    %118 = vector.shape_cast %117 : vector<4xf32> to vector<1x4xf32>
    %119 = arith.mulf %115, %14 : vector<10x4xf32>
    %cst_43 = arith.constant dense<0.000000e+00> : vector<4xf32>
    %120 = vector.multi_reduction <add>, %119, %cst_43 [0] : vector<10x4xf32> to vector<4xf32>
    %121 = vector.shape_cast %120 : vector<4xf32> to vector<1x4xf32>
    %122 = arith.addf %46, %105 : vector<1x4xf32>
    %123 = arith.mulf %102, %118 : vector<1x4xf32>
    %124 = arith.addf %122, %123 : vector<1x4xf32>
    %125 = arith.addf %49, %108 : vector<1x4xf32>
    %126 = arith.mulf %102, %121 : vector<1x4xf32>
    %127 = arith.addf %125, %126 : vector<1x4xf32>
    %128 = arith.index_cast %c1_i32 : i32 to index
    %c0_44 = arith.constant 0 : index
    %c0_45 = arith.constant 0 : index
    %129 = vector.load %arg5[%128, %c0_44, %c0_45] : memref<6x4x4xf32, #tpu.memory_space<vmem>>, vector<1x1x4xf32>
    %130 = vector.shape_cast %129 : vector<1x1x4xf32> to vector<1x4xf32>
    %131 = vector.shape_cast %124 : vector<1x4xf32> to vector<1x1x4xf32>
    tpu.vector_store %arg5[%128, %c0_44, %c0_45], %131 {strides = array<i32>} : memref<6x4x4xf32, #tpu.memory_space<vmem>>, vector<1x1x4xf32>,
    %132 = arith.index_cast %c1_i32 : i32 to index
    %c2_46 = arith.constant 2 : index
    %c0_47 = arith.constant 0 : index
    %133 = vector.load %arg5[%132, %c2_46, %c0_47] : memref<6x4x4xf32, #tpu.memory_space<vmem>>, vector<1x1x4xf32>
    %134 = vector.shape_cast %133 : vector<1x1x4xf32> to vector<1x4xf32>
    %135 = vector.shape_cast %127 : vector<1x4xf32> to vector<1x1x4xf32>
    tpu.vector_store %arg5[%132, %c2_46, %c0_47], %135 {strides = array<i32>} : memref<6x4x4xf32, #tpu.memory_space<vmem>>, vector<1x1x4xf32>,
    %136 = arith.index_cast %c1_i32 : i32 to index
    %c16_48 = arith.constant 16 : index
    %c0_49 = arith.constant 0 : index
    %137 = vector.load %arg2[%136, %c16_48, %c0_49] : memref<6x32x4xf32, #tpu.memory_space<vmem>>, vector<1x10x4xf32>
    %138 = vector.shape_cast %137 : vector<1x10x4xf32> to vector<10x4xf32>
    %139 = arith.index_cast %c1_i32 : i32 to index
    %c26_50 = arith.constant 26 : index
    %c0_51 = arith.constant 0 : index
    %140 = vector.load %arg2[%139, %c26_50, %c0_51] : memref<6x32x4xf32, #tpu.memory_space<vmem>>, vector<1x1x4xf32>
    %141 = vector.shape_cast %140 : vector<1x1x4xf32> to vector<1x4xf32>
    %142 = arith.index_cast %c1_i32 : i32 to index
    %c27_52 = arith.constant 27 : index
    %c0_53 = arith.constant 0 : index
    %143 = vector.load %arg2[%142, %c27_52, %c0_53] : memref<6x32x4xf32, #tpu.memory_space<vmem>>, vector<1x1x4xf32>
    %144 = vector.shape_cast %143 : vector<1x1x4xf32> to vector<1x4xf32>
    %145 = arith.index_cast %c1_i32 : i32 to index
    %c28_54 = arith.constant 28 : index
    %c0_55 = arith.constant 0 : index
    %146 = vector.load %arg2[%145, %c28_54, %c0_55] : memref<6x32x4xf32, #tpu.memory_space<vmem>>, vector<1x1x4xf32>
    %147 = vector.shape_cast %146 : vector<1x1x4xf32> to vector<1x4xf32>
    %148 = vector.broadcast %85 : vector<1x4xf32> to vector<10x4xf32>
    %149 = arith.mulf %148, %5 : vector<10x4xf32>
    %150 = arith.addf %138, %149 : vector<10x4xf32>
    %151 = vector.broadcast %88 : vector<1x4xf32> to vector<10x4xf32>
    %152 = arith.mulf %151, %8 : vector<10x4xf32>
    %153 = arith.addf %150, %152 : vector<10x4xf32>
    %154 = math.tanh %153 : vector<10x4xf32>
    %155 = arith.mulf %154, %11 : vector<10x4xf32>
    %cst_56 = arith.constant dense<0.000000e+00> : vector<4xf32>
    %156 = vector.multi_reduction <add>, %155, %cst_56 [0] : vector<10x4xf32> to vector<4xf32>
    %157 = vector.shape_cast %156 : vector<4xf32> to vector<1x4xf32>
    %158 = arith.mulf %154, %14 : vector<10x4xf32>
    %cst_57 = arith.constant dense<0.000000e+00> : vector<4xf32>
    %159 = vector.multi_reduction <add>, %158, %cst_57 [0] : vector<10x4xf32> to vector<4xf32>
    %160 = vector.shape_cast %159 : vector<4xf32> to vector<1x4xf32>
    %161 = arith.addf %85, %144 : vector<1x4xf32>
    %162 = arith.mulf %141, %157 : vector<1x4xf32>
    %163 = arith.addf %161, %162 : vector<1x4xf32>
    %164 = arith.addf %88, %147 : vector<1x4xf32>
    %165 = arith.mulf %141, %160 : vector<1x4xf32>
    %166 = arith.addf %164, %165 : vector<1x4xf32>
    %167 = arith.index_cast %c1_i32 : i32 to index
    %c1_58 = arith.constant 1 : index
    %c0_59 = arith.constant 0 : index
    %168 = vector.load %arg5[%167, %c1_58, %c0_59] : memref<6x4x4xf32, #tpu.memory_space<vmem>>, vector<1x1x4xf32>
    %169 = vector.shape_cast %168 : vector<1x1x4xf32> to vector<1x4xf32>
    %170 = vector.shape_cast %163 : vector<1x4xf32> to vector<1x1x4xf32>
    tpu.vector_store %arg5[%167, %c1_58, %c0_59], %170 {strides = array<i32>} : memref<6x4x4xf32, #tpu.memory_space<vmem>>, vector<1x1x4xf32>,
    %171 = arith.index_cast %c1_i32 : i32 to index
    %c3_60 = arith.constant 3 : index
    %c0_61 = arith.constant 0 : index
    %172 = vector.load %arg5[%171, %c3_60, %c0_61] : memref<6x4x4xf32, #tpu.memory_space<vmem>>, vector<1x1x4xf32>
    %173 = vector.shape_cast %172 : vector<1x1x4xf32> to vector<1x4xf32>
    %174 = vector.shape_cast %166 : vector<1x4xf32> to vector<1x1x4xf32>
    tpu.vector_store %arg5[%171, %c3_60, %c0_61], %174 {strides = array<i32>} : memref<6x4x4xf32, #tpu.memory_space<vmem>>, vector<1x1x4xf32>,
    %c2_i32 = arith.constant 2 : i32
    %175 = arith.index_cast %c2_i32 : i32 to index
    %c0_62 = arith.constant 0 : index
    %c0_63 = arith.constant 0 : index
    %176 = vector.load %arg2[%175, %c0_62, %c0_63] : memref<6x32x4xf32, #tpu.memory_space<vmem>>, vector<1x10x4xf32>
    %177 = vector.shape_cast %176 : vector<1x10x4xf32> to vector<10x4xf32>
    %178 = arith.index_cast %c2_i32 : i32 to index
    %c10_64 = arith.constant 10 : index
    %c0_65 = arith.constant 0 : index
    %179 = vector.load %arg2[%178, %c10_64, %c0_65] : memref<6x32x4xf32, #tpu.memory_space<vmem>>, vector<1x1x4xf32>
    %180 = vector.shape_cast %179 : vector<1x1x4xf32> to vector<1x4xf32>
    %181 = arith.index_cast %c2_i32 : i32 to index
    %c11_66 = arith.constant 11 : index
    %c0_67 = arith.constant 0 : index
    %182 = vector.load %arg2[%181, %c11_66, %c0_67] : memref<6x32x4xf32, #tpu.memory_space<vmem>>, vector<1x1x4xf32>
    %183 = vector.shape_cast %182 : vector<1x1x4xf32> to vector<1x4xf32>
    %184 = arith.index_cast %c2_i32 : i32 to index
    %c12_68 = arith.constant 12 : index
    %c0_69 = arith.constant 0 : index
    %185 = vector.load %arg2[%184, %c12_68, %c0_69] : memref<6x32x4xf32, #tpu.memory_space<vmem>>, vector<1x1x4xf32>
    %186 = vector.shape_cast %185 : vector<1x1x4xf32> to vector<1x4xf32>
    %187 = vector.broadcast %124 : vector<1x4xf32> to vector<10x4xf32>
    %188 = arith.mulf %187, %5 : vector<10x4xf32>
    %189 = arith.addf %177, %188 : vector<10x4xf32>
    %190 = vector.broadcast %127 : vector<1x4xf32> to vector<10x4xf32>
    %191 = arith.mulf %190, %8 : vector<10x4xf32>
    %192 = arith.addf %189, %191 : vector<10x4xf32>
    %193 = math.tanh %192 : vector<10x4xf32>
    %194 = arith.mulf %193, %11 : vector<10x4xf32>
    %cst_70 = arith.constant dense<0.000000e+00> : vector<4xf32>
    %195 = vector.multi_reduction <add>, %194, %cst_70 [0] : vector<10x4xf32> to vector<4xf32>
    %196 = vector.shape_cast %195 : vector<4xf32> to vector<1x4xf32>
    %197 = arith.mulf %193, %14 : vector<10x4xf32>
    %cst_71 = arith.constant dense<0.000000e+00> : vector<4xf32>
    %198 = vector.multi_reduction <add>, %197, %cst_71 [0] : vector<10x4xf32> to vector<4xf32>
    %199 = vector.shape_cast %198 : vector<4xf32> to vector<1x4xf32>
    %200 = arith.addf %124, %183 : vector<1x4xf32>
    %201 = arith.mulf %180, %196 : vector<1x4xf32>
    %202 = arith.addf %200, %201 : vector<1x4xf32>
    %203 = arith.addf %127, %186 : vector<1x4xf32>
    %204 = arith.mulf %180, %199 : vector<1x4xf32>
    %205 = arith.addf %203, %204 : vector<1x4xf32>
    %206 = arith.index_cast %c2_i32 : i32 to index
    %c0_72 = arith.constant 0 : index
    %c0_73 = arith.constant 0 : index
    %207 = vector.load %arg5[%206, %c0_72, %c0_73] : memref<6x4x4xf32, #tpu.memory_space<vmem>>, vector<1x1x4xf32>
    %208 = vector.shape_cast %207 : vector<1x1x4xf32> to vector<1x4xf32>
    %209 = vector.shape_cast %202 : vector<1x4xf32> to vector<1x1x4xf32>
    tpu.vector_store %arg5[%206, %c0_72, %c0_73], %209 {strides = array<i32>} : memref<6x4x4xf32, #tpu.memory_space<vmem>>, vector<1x1x4xf32>,
    %210 = arith.index_cast %c2_i32 : i32 to index
    %c2_74 = arith.constant 2 : index
    %c0_75 = arith.constant 0 : index
    %211 = vector.load %arg5[%210, %c2_74, %c0_75] : memref<6x4x4xf32, #tpu.memory_space<vmem>>, vector<1x1x4xf32>
    %212 = vector.shape_cast %211 : vector<1x1x4xf32> to vector<1x4xf32>
    %213 = vector.shape_cast %205 : vector<1x4xf32> to vector<1x1x4xf32>
    tpu.vector_store %arg5[%210, %c2_74, %c0_75], %213 {strides = array<i32>} : memref<6x4x4xf32, #tpu.memory_space<vmem>>, vector<1x1x4xf32>,
    %214 = arith.index_cast %c2_i32 : i32 to index
    %c16_76 = arith.constant 16 : index
    %c0_77 = arith.constant 0 : index
    %215 = vector.load %arg2[%214, %c16_76, %c0_77] : memref<6x32x4xf32, #tpu.memory_space<vmem>>, vector<1x10x4xf32>
    %216 = vector.shape_cast %215 : vector<1x10x4xf32> to vector<10x4xf32>
    %217 = arith.index_cast %c2_i32 : i32 to index
    %c26_78 = arith.constant 26 : index
    %c0_79 = arith.constant 0 : index
    %218 = vector.load %arg2[%217, %c26_78, %c0_79] : memref<6x32x4xf32, #tpu.memory_space<vmem>>, vector<1x1x4xf32>
    %219 = vector.shape_cast %218 : vector<1x1x4xf32> to vector<1x4xf32>
    %220 = arith.index_cast %c2_i32 : i32 to index
    %c27_80 = arith.constant 27 : index
    %c0_81 = arith.constant 0 : index
    %221 = vector.load %arg2[%220, %c27_80, %c0_81] : memref<6x32x4xf32, #tpu.memory_space<vmem>>, vector<1x1x4xf32>
    %222 = vector.shape_cast %221 : vector<1x1x4xf32> to vector<1x4xf32>
    %223 = arith.index_cast %c2_i32 : i32 to index
    %c28_82 = arith.constant 28 : index
    %c0_83 = arith.constant 0 : index
    %224 = vector.load %arg2[%223, %c28_82, %c0_83] : memref<6x32x4xf32, #tpu.memory_space<vmem>>, vector<1x1x4xf32>
    %225 = vector.shape_cast %224 : vector<1x1x4xf32> to vector<1x4xf32>
    %226 = vector.broadcast %163 : vector<1x4xf32> to vector<10x4xf32>
    %227 = arith.mulf %226, %5 : vector<10x4xf32>
    %228 = arith.addf %216, %227 : vector<10x4xf32>
    %229 = vector.broadcast %166 : vector<1x4xf32> to vector<10x4xf32>
    %230 = arith.mulf %229, %8 : vector<10x4xf32>
    %231 = arith.addf %228, %230 : vector<10x4xf32>
    %232 = math.tanh %231 : vector<10x4xf32>
    %233 = arith.mulf %232, %11 : vector<10x4xf32>
    %cst_84 = arith.constant dense<0.000000e+00> : vector<4xf32>
    %234 = vector.multi_reduction <add>, %233, %cst_84 [0] : vector<10x4xf32> to vector<4xf32>
    %235 = vector.shape_cast %234 : vector<4xf32> to vector<1x4xf32>
    %236 = arith.mulf %232, %14 : vector<10x4xf32>
    %cst_85 = arith.constant dense<0.000000e+00> : vector<4xf32>
    %237 = vector.multi_reduction <add>, %236, %cst_85 [0] : vector<10x4xf32> to vector<4xf32>
    %238 = vector.shape_cast %237 : vector<4xf32> to vector<1x4xf32>
    %239 = arith.addf %163, %222 : vector<1x4xf32>
    %240 = arith.mulf %219, %235 : vector<1x4xf32>
    %241 = arith.addf %239, %240 : vector<1x4xf32>
    %242 = arith.addf %166, %225 : vector<1x4xf32>
    %243 = arith.mulf %219, %238 : vector<1x4xf32>
    %244 = arith.addf %242, %243 : vector<1x4xf32>
    %245 = arith.index_cast %c2_i32 : i32 to index
    %c1_86 = arith.constant 1 : index
    %c0_87 = arith.constant 0 : index
    %246 = vector.load %arg5[%245, %c1_86, %c0_87] : memref<6x4x4xf32, #tpu.memory_space<vmem>>, vector<1x1x4xf32>
    %247 = vector.shape_cast %246 : vector<1x1x4xf32> to vector<1x4xf32>
    %248 = vector.shape_cast %241 : vector<1x4xf32> to vector<1x1x4xf32>
    tpu.vector_store %arg5[%245, %c1_86, %c0_87], %248 {strides = array<i32>} : memref<6x4x4xf32, #tpu.memory_space<vmem>>, vector<1x1x4xf32>,
    %249 = arith.index_cast %c2_i32 : i32 to index
    %c3_88 = arith.constant 3 : index
    %c0_89 = arith.constant 0 : index
    %250 = vector.load %arg5[%249, %c3_88, %c0_89] : memref<6x4x4xf32, #tpu.memory_space<vmem>>, vector<1x1x4xf32>
    %251 = vector.shape_cast %250 : vector<1x1x4xf32> to vector<1x4xf32>
    %252 = vector.shape_cast %244 : vector<1x4xf32> to vector<1x1x4xf32>
    tpu.vector_store %arg5[%249, %c3_88, %c0_89], %252 {strides = array<i32>} : memref<6x4x4xf32, #tpu.memory_space<vmem>>, vector<1x1x4xf32>,
    %c3_i32 = arith.constant 3 : i32
    %253 = arith.index_cast %c3_i32 : i32 to index
    %c0_90 = arith.constant 0 : index
    %c0_91 = arith.constant 0 : index
    %254 = vector.load %arg2[%253, %c0_90, %c0_91] : memref<6x32x4xf32, #tpu.memory_space<vmem>>, vector<1x10x4xf32>
    %255 = vector.shape_cast %254 : vector<1x10x4xf32> to vector<10x4xf32>
    %256 = arith.index_cast %c3_i32 : i32 to index
    %c10_92 = arith.constant 10 : index
    %c0_93 = arith.constant 0 : index
    %257 = vector.load %arg2[%256, %c10_92, %c0_93] : memref<6x32x4xf32, #tpu.memory_space<vmem>>, vector<1x1x4xf32>
    %258 = vector.shape_cast %257 : vector<1x1x4xf32> to vector<1x4xf32>
    %259 = arith.index_cast %c3_i32 : i32 to index
    %c11_94 = arith.constant 11 : index
    %c0_95 = arith.constant 0 : index
    %260 = vector.load %arg2[%259, %c11_94, %c0_95] : memref<6x32x4xf32, #tpu.memory_space<vmem>>, vector<1x1x4xf32>
    %261 = vector.shape_cast %260 : vector<1x1x4xf32> to vector<1x4xf32>
    %262 = arith.index_cast %c3_i32 : i32 to index
    %c12_96 = arith.constant 12 : index
    %c0_97 = arith.constant 0 : index
    %263 = vector.load %arg2[%262, %c12_96, %c0_97] : memref<6x32x4xf32, #tpu.memory_space<vmem>>, vector<1x1x4xf32>
    %264 = vector.shape_cast %263 : vector<1x1x4xf32> to vector<1x4xf32>
    %265 = vector.broadcast %202 : vector<1x4xf32> to vector<10x4xf32>
    %266 = arith.mulf %265, %5 : vector<10x4xf32>
    %267 = arith.addf %255, %266 : vector<10x4xf32>
    %268 = vector.broadcast %205 : vector<1x4xf32> to vector<10x4xf32>
    %269 = arith.mulf %268, %8 : vector<10x4xf32>
    %270 = arith.addf %267, %269 : vector<10x4xf32>
    %271 = math.tanh %270 : vector<10x4xf32>
    %272 = arith.mulf %271, %11 : vector<10x4xf32>
    %cst_98 = arith.constant dense<0.000000e+00> : vector<4xf32>
    %273 = vector.multi_reduction <add>, %272, %cst_98 [0] : vector<10x4xf32> to vector<4xf32>
    %274 = vector.shape_cast %273 : vector<4xf32> to vector<1x4xf32>
    %275 = arith.mulf %271, %14 : vector<10x4xf32>
    %cst_99 = arith.constant dense<0.000000e+00> : vector<4xf32>
    %276 = vector.multi_reduction <add>, %275, %cst_99 [0] : vector<10x4xf32> to vector<4xf32>
    %277 = vector.shape_cast %276 : vector<4xf32> to vector<1x4xf32>
    %278 = arith.addf %202, %261 : vector<1x4xf32>
    %279 = arith.mulf %258, %274 : vector<1x4xf32>
    %280 = arith.addf %278, %279 : vector<1x4xf32>
    %281 = arith.addf %205, %264 : vector<1x4xf32>
    %282 = arith.mulf %258, %277 : vector<1x4xf32>
    %283 = arith.addf %281, %282 : vector<1x4xf32>
    %284 = arith.index_cast %c3_i32 : i32 to index
    %c0_100 = arith.constant 0 : index
    %c0_101 = arith.constant 0 : index
    %285 = vector.load %arg5[%284, %c0_100, %c0_101] : memref<6x4x4xf32, #tpu.memory_space<vmem>>, vector<1x1x4xf32>
    %286 = vector.shape_cast %285 : vector<1x1x4xf32> to vector<1x4xf32>
    %287 = vector.shape_cast %280 : vector<1x4xf32> to vector<1x1x4xf32>
    tpu.vector_store %arg5[%284, %c0_100, %c0_101], %287 {strides = array<i32>} : memref<6x4x4xf32, #tpu.memory_space<vmem>>, vector<1x1x4xf32>,
    %288 = arith.index_cast %c3_i32 : i32 to index
    %c2_102 = arith.constant 2 : index
    %c0_103 = arith.constant 0 : index
    %289 = vector.load %arg5[%288, %c2_102, %c0_103] : memref<6x4x4xf32, #tpu.memory_space<vmem>>, vector<1x1x4xf32>
    %290 = vector.shape_cast %289 : vector<1x1x4xf32> to vector<1x4xf32>
    %291 = vector.shape_cast %283 : vector<1x4xf32> to vector<1x1x4xf32>
    tpu.vector_store %arg5[%288, %c2_102, %c0_103], %291 {strides = array<i32>} : memref<6x4x4xf32, #tpu.memory_space<vmem>>, vector<1x1x4xf32>,
    %292 = arith.index_cast %c3_i32 : i32 to index
    %c16_104 = arith.constant 16 : index
    %c0_105 = arith.constant 0 : index
    %293 = vector.load %arg2[%292, %c16_104, %c0_105] : memref<6x32x4xf32, #tpu.memory_space<vmem>>, vector<1x10x4xf32>
    %294 = vector.shape_cast %293 : vector<1x10x4xf32> to vector<10x4xf32>
    %295 = arith.index_cast %c3_i32 : i32 to index
    %c26_106 = arith.constant 26 : index
    %c0_107 = arith.constant 0 : index
    %296 = vector.load %arg2[%295, %c26_106, %c0_107] : memref<6x32x4xf32, #tpu.memory_space<vmem>>, vector<1x1x4xf32>
    %297 = vector.shape_cast %296 : vector<1x1x4xf32> to vector<1x4xf32>
    %298 = arith.index_cast %c3_i32 : i32 to index
    %c27_108 = arith.constant 27 : index
    %c0_109 = arith.constant 0 : index
    %299 = vector.load %arg2[%298, %c27_108, %c0_109] : memref<6x32x4xf32, #tpu.memory_space<vmem>>, vector<1x1x4xf32>
    %300 = vector.shape_cast %299 : vector<1x1x4xf32> to vector<1x4xf32>
    %301 = arith.index_cast %c3_i32 : i32 to index
    %c28_110 = arith.constant 28 : index
    %c0_111 = arith.constant 0 : index
    %302 = vector.load %arg2[%301, %c28_110, %c0_111] : memref<6x32x4xf32, #tpu.memory_space<vmem>>, vector<1x1x4xf32>
    %303 = vector.shape_cast %302 : vector<1x1x4xf32> to vector<1x4xf32>
    %304 = vector.broadcast %241 : vector<1x4xf32> to vector<10x4xf32>
    %305 = arith.mulf %304, %5 : vector<10x4xf32>
    %306 = arith.addf %294, %305 : vector<10x4xf32>
    %307 = vector.broadcast %244 : vector<1x4xf32> to vector<10x4xf32>
    %308 = arith.mulf %307, %8 : vector<10x4xf32>
    %309 = arith.addf %306, %308 : vector<10x4xf32>
    %310 = math.tanh %309 : vector<10x4xf32>
    %311 = arith.mulf %310, %11 : vector<10x4xf32>
    %cst_112 = arith.constant dense<0.000000e+00> : vector<4xf32>
    %312 = vector.multi_reduction <add>, %311, %cst_112 [0] : vector<10x4xf32> to vector<4xf32>
    %313 = vector.shape_cast %312 : vector<4xf32> to vector<1x4xf32>
    %314 = arith.mulf %310, %14 : vector<10x4xf32>
    %cst_113 = arith.constant dense<0.000000e+00> : vector<4xf32>
    %315 = vector.multi_reduction <add>, %314, %cst_113 [0] : vector<10x4xf32> to vector<4xf32>
    %316 = vector.shape_cast %315 : vector<4xf32> to vector<1x4xf32>
    %317 = arith.addf %241, %300 : vector<1x4xf32>
    %318 = arith.mulf %297, %313 : vector<1x4xf32>
    %319 = arith.addf %317, %318 : vector<1x4xf32>
    %320 = arith.addf %244, %303 : vector<1x4xf32>
    %321 = arith.mulf %297, %316 : vector<1x4xf32>
    %322 = arith.addf %320, %321 : vector<1x4xf32>
    %323 = arith.index_cast %c3_i32 : i32 to index
    %c1_114 = arith.constant 1 : index
    %c0_115 = arith.constant 0 : index
    %324 = vector.load %arg5[%323, %c1_114, %c0_115] : memref<6x4x4xf32, #tpu.memory_space<vmem>>, vector<1x1x4xf32>
    %325 = vector.shape_cast %324 : vector<1x1x4xf32> to vector<1x4xf32>
    %326 = vector.shape_cast %319 : vector<1x4xf32> to vector<1x1x4xf32>
    tpu.vector_store %arg5[%323, %c1_114, %c0_115], %326 {strides = array<i32>} : memref<6x4x4xf32, #tpu.memory_space<vmem>>, vector<1x1x4xf32>,
    %327 = arith.index_cast %c3_i32 : i32 to index
    %c3_116 = arith.constant 3 : index
    %c0_117 = arith.constant 0 : index
    %328 = vector.load %arg5[%327, %c3_116, %c0_117] : memref<6x4x4xf32, #tpu.memory_space<vmem>>, vector<1x1x4xf32>
    %329 = vector.shape_cast %328 : vector<1x1x4xf32> to vector<1x4xf32>
    %330 = vector.shape_cast %322 : vector<1x4xf32> to vector<1x1x4xf32>
    tpu.vector_store %arg5[%327, %c3_116, %c0_117], %330 {strides = array<i32>} : memref<6x4x4xf32, #tpu.memory_space<vmem>>, vector<1x1x4xf32>,
    %c4_i32 = arith.constant 4 : i32
    %331 = arith.index_cast %c4_i32 : i32 to index
    %c0_118 = arith.constant 0 : index
    %c0_119 = arith.constant 0 : index
    %332 = vector.load %arg2[%331, %c0_118, %c0_119] : memref<6x32x4xf32, #tpu.memory_space<vmem>>, vector<1x10x4xf32>
    %333 = vector.shape_cast %332 : vector<1x10x4xf32> to vector<10x4xf32>
    %334 = arith.index_cast %c4_i32 : i32 to index
    %c10_120 = arith.constant 10 : index
    %c0_121 = arith.constant 0 : index
    %335 = vector.load %arg2[%334, %c10_120, %c0_121] : memref<6x32x4xf32, #tpu.memory_space<vmem>>, vector<1x1x4xf32>
    %336 = vector.shape_cast %335 : vector<1x1x4xf32> to vector<1x4xf32>
    %337 = arith.index_cast %c4_i32 : i32 to index
    %c11_122 = arith.constant 11 : index
    %c0_123 = arith.constant 0 : index
    %338 = vector.load %arg2[%337, %c11_122, %c0_123] : memref<6x32x4xf32, #tpu.memory_space<vmem>>, vector<1x1x4xf32>
    %339 = vector.shape_cast %338 : vector<1x1x4xf32> to vector<1x4xf32>
    %340 = arith.index_cast %c4_i32 : i32 to index
    %c12_124 = arith.constant 12 : index
    %c0_125 = arith.constant 0 : index
    %341 = vector.load %arg2[%340, %c12_124, %c0_125] : memref<6x32x4xf32, #tpu.memory_space<vmem>>, vector<1x1x4xf32>
    %342 = vector.shape_cast %341 : vector<1x1x4xf32> to vector<1x4xf32>
    %343 = vector.broadcast %280 : vector<1x4xf32> to vector<10x4xf32>
    %344 = arith.mulf %343, %5 : vector<10x4xf32>
    %345 = arith.addf %333, %344 : vector<10x4xf32>
    %346 = vector.broadcast %283 : vector<1x4xf32> to vector<10x4xf32>
    %347 = arith.mulf %346, %8 : vector<10x4xf32>
    %348 = arith.addf %345, %347 : vector<10x4xf32>
    %349 = math.tanh %348 : vector<10x4xf32>
    %350 = arith.mulf %349, %11 : vector<10x4xf32>
    %cst_126 = arith.constant dense<0.000000e+00> : vector<4xf32>
    %351 = vector.multi_reduction <add>, %350, %cst_126 [0] : vector<10x4xf32> to vector<4xf32>
    %352 = vector.shape_cast %351 : vector<4xf32> to vector<1x4xf32>
    %353 = arith.mulf %349, %14 : vector<10x4xf32>
    %cst_127 = arith.constant dense<0.000000e+00> : vector<4xf32>
    %354 = vector.multi_reduction <add>, %353, %cst_127 [0] : vector<10x4xf32> to vector<4xf32>
    %355 = vector.shape_cast %354 : vector<4xf32> to vector<1x4xf32>
    %356 = arith.addf %280, %339 : vector<1x4xf32>
    %357 = arith.mulf %336, %352 : vector<1x4xf32>
    %358 = arith.addf %356, %357 : vector<1x4xf32>
    %359 = arith.addf %283, %342 : vector<1x4xf32>
    %360 = arith.mulf %336, %355 : vector<1x4xf32>
    %361 = arith.addf %359, %360 : vector<1x4xf32>
    %362 = arith.index_cast %c4_i32 : i32 to index
    %c0_128 = arith.constant 0 : index
    %c0_129 = arith.constant 0 : index
    %363 = vector.load %arg5[%362, %c0_128, %c0_129] : memref<6x4x4xf32, #tpu.memory_space<vmem>>, vector<1x1x4xf32>
    %364 = vector.shape_cast %363 : vector<1x1x4xf32> to vector<1x4xf32>
    %365 = vector.shape_cast %358 : vector<1x4xf32> to vector<1x1x4xf32>
    tpu.vector_store %arg5[%362, %c0_128, %c0_129], %365 {strides = array<i32>} : memref<6x4x4xf32, #tpu.memory_space<vmem>>, vector<1x1x4xf32>,
    %366 = arith.index_cast %c4_i32 : i32 to index
    %c2_130 = arith.constant 2 : index
    %c0_131 = arith.constant 0 : index
    %367 = vector.load %arg5[%366, %c2_130, %c0_131] : memref<6x4x4xf32, #tpu.memory_space<vmem>>, vector<1x1x4xf32>
    %368 = vector.shape_cast %367 : vector<1x1x4xf32> to vector<1x4xf32>
    %369 = vector.shape_cast %361 : vector<1x4xf32> to vector<1x1x4xf32>
    tpu.vector_store %arg5[%366, %c2_130, %c0_131], %369 {strides = array<i32>} : memref<6x4x4xf32, #tpu.memory_space<vmem>>, vector<1x1x4xf32>,
    %370 = arith.index_cast %c4_i32 : i32 to index
    %c16_132 = arith.constant 16 : index
    %c0_133 = arith.constant 0 : index
    %371 = vector.load %arg2[%370, %c16_132, %c0_133] : memref<6x32x4xf32, #tpu.memory_space<vmem>>, vector<1x10x4xf32>
    %372 = vector.shape_cast %371 : vector<1x10x4xf32> to vector<10x4xf32>
    %373 = arith.index_cast %c4_i32 : i32 to index
    %c26_134 = arith.constant 26 : index
    %c0_135 = arith.constant 0 : index
    %374 = vector.load %arg2[%373, %c26_134, %c0_135] : memref<6x32x4xf32, #tpu.memory_space<vmem>>, vector<1x1x4xf32>
    %375 = vector.shape_cast %374 : vector<1x1x4xf32> to vector<1x4xf32>
    %376 = arith.index_cast %c4_i32 : i32 to index
    %c27_136 = arith.constant 27 : index
    %c0_137 = arith.constant 0 : index
    %377 = vector.load %arg2[%376, %c27_136, %c0_137] : memref<6x32x4xf32, #tpu.memory_space<vmem>>, vector<1x1x4xf32>
    %378 = vector.shape_cast %377 : vector<1x1x4xf32> to vector<1x4xf32>
    %379 = arith.index_cast %c4_i32 : i32 to index
    %c28_138 = arith.constant 28 : index
    %c0_139 = arith.constant 0 : index
    %380 = vector.load %arg2[%379, %c28_138, %c0_139] : memref<6x32x4xf32, #tpu.memory_space<vmem>>, vector<1x1x4xf32>
    %381 = vector.shape_cast %380 : vector<1x1x4xf32> to vector<1x4xf32>
    %382 = vector.broadcast %319 : vector<1x4xf32> to vector<10x4xf32>
    %383 = arith.mulf %382, %5 : vector<10x4xf32>
    %384 = arith.addf %372, %383 : vector<10x4xf32>
    %385 = vector.broadcast %322 : vector<1x4xf32> to vector<10x4xf32>
    %386 = arith.mulf %385, %8 : vector<10x4xf32>
    %387 = arith.addf %384, %386 : vector<10x4xf32>
    %388 = math.tanh %387 : vector<10x4xf32>
    %389 = arith.mulf %388, %11 : vector<10x4xf32>
    %cst_140 = arith.constant dense<0.000000e+00> : vector<4xf32>
    %390 = vector.multi_reduction <add>, %389, %cst_140 [0] : vector<10x4xf32> to vector<4xf32>
    %391 = vector.shape_cast %390 : vector<4xf32> to vector<1x4xf32>
    %392 = arith.mulf %388, %14 : vector<10x4xf32>
    %cst_141 = arith.constant dense<0.000000e+00> : vector<4xf32>
    %393 = vector.multi_reduction <add>, %392, %cst_141 [0] : vector<10x4xf32> to vector<4xf32>
    %394 = vector.shape_cast %393 : vector<4xf32> to vector<1x4xf32>
    %395 = arith.addf %319, %378 : vector<1x4xf32>
    %396 = arith.mulf %375, %391 : vector<1x4xf32>
    %397 = arith.addf %395, %396 : vector<1x4xf32>
    %398 = arith.addf %322, %381 : vector<1x4xf32>
    %399 = arith.mulf %375, %394 : vector<1x4xf32>
    %400 = arith.addf %398, %399 : vector<1x4xf32>
    %401 = arith.index_cast %c4_i32 : i32 to index
    %c1_142 = arith.constant 1 : index
    %c0_143 = arith.constant 0 : index
    %402 = vector.load %arg5[%401, %c1_142, %c0_143] : memref<6x4x4xf32, #tpu.memory_space<vmem>>, vector<1x1x4xf32>
    %403 = vector.shape_cast %402 : vector<1x1x4xf32> to vector<1x4xf32>
    %404 = vector.shape_cast %397 : vector<1x4xf32> to vector<1x1x4xf32>
    tpu.vector_store %arg5[%401, %c1_142, %c0_143], %404 {strides = array<i32>} : memref<6x4x4xf32, #tpu.memory_space<vmem>>, vector<1x1x4xf32>,
    %405 = arith.index_cast %c4_i32 : i32 to index
    %c3_144 = arith.constant 3 : index
    %c0_145 = arith.constant 0 : index
    %406 = vector.load %arg5[%405, %c3_144, %c0_145] : memref<6x4x4xf32, #tpu.memory_space<vmem>>, vector<1x1x4xf32>
    %407 = vector.shape_cast %406 : vector<1x1x4xf32> to vector<1x4xf32>
    %408 = vector.shape_cast %400 : vector<1x4xf32> to vector<1x1x4xf32>
    tpu.vector_store %arg5[%405, %c3_144, %c0_145], %408 {strides = array<i32>} : memref<6x4x4xf32, #tpu.memory_space<vmem>>, vector<1x1x4xf32>,
    %c5_i32 = arith.constant 5 : i32
    %409 = arith.index_cast %c5_i32 : i32 to index
    %c0_146 = arith.constant 0 : index
    %c0_147 = arith.constant 0 : index
    %410 = vector.load %arg2[%409, %c0_146, %c0_147] : memref<6x32x4xf32, #tpu.memory_space<vmem>>, vector<1x10x4xf32>
    %411 = vector.shape_cast %410 : vector<1x10x4xf32> to vector<10x4xf32>
    %412 = arith.index_cast %c5_i32 : i32 to index
    %c10_148 = arith.constant 10 : index
    %c0_149 = arith.constant 0 : index
    %413 = vector.load %arg2[%412, %c10_148, %c0_149] : memref<6x32x4xf32, #tpu.memory_space<vmem>>, vector<1x1x4xf32>
    %414 = vector.shape_cast %413 : vector<1x1x4xf32> to vector<1x4xf32>
    %415 = arith.index_cast %c5_i32 : i32 to index
    %c11_150 = arith.constant 11 : index
    %c0_151 = arith.constant 0 : index
    %416 = vector.load %arg2[%415, %c11_150, %c0_151] : memref<6x32x4xf32, #tpu.memory_space<vmem>>, vector<1x1x4xf32>
    %417 = vector.shape_cast %416 : vector<1x1x4xf32> to vector<1x4xf32>
    %418 = arith.index_cast %c5_i32 : i32 to index
    %c12_152 = arith.constant 12 : index
    %c0_153 = arith.constant 0 : index
    %419 = vector.load %arg2[%418, %c12_152, %c0_153] : memref<6x32x4xf32, #tpu.memory_space<vmem>>, vector<1x1x4xf32>
    %420 = vector.shape_cast %419 : vector<1x1x4xf32> to vector<1x4xf32>
    %421 = vector.broadcast %358 : vector<1x4xf32> to vector<10x4xf32>
    %422 = arith.mulf %421, %5 : vector<10x4xf32>
    %423 = arith.addf %411, %422 : vector<10x4xf32>
    %424 = vector.broadcast %361 : vector<1x4xf32> to vector<10x4xf32>
    %425 = arith.mulf %424, %8 : vector<10x4xf32>
    %426 = arith.addf %423, %425 : vector<10x4xf32>
    %427 = math.tanh %426 : vector<10x4xf32>
    %428 = arith.mulf %427, %11 : vector<10x4xf32>
    %cst_154 = arith.constant dense<0.000000e+00> : vector<4xf32>
    %429 = vector.multi_reduction <add>, %428, %cst_154 [0] : vector<10x4xf32> to vector<4xf32>
    %430 = vector.shape_cast %429 : vector<4xf32> to vector<1x4xf32>
    %431 = arith.mulf %427, %14 : vector<10x4xf32>
    %cst_155 = arith.constant dense<0.000000e+00> : vector<4xf32>
    %432 = vector.multi_reduction <add>, %431, %cst_155 [0] : vector<10x4xf32> to vector<4xf32>
    %433 = vector.shape_cast %432 : vector<4xf32> to vector<1x4xf32>
    %434 = arith.addf %358, %417 : vector<1x4xf32>
    %435 = arith.mulf %414, %430 : vector<1x4xf32>
    %436 = arith.addf %434, %435 : vector<1x4xf32>
    %437 = arith.addf %361, %420 : vector<1x4xf32>
    %438 = arith.mulf %414, %433 : vector<1x4xf32>
    %439 = arith.addf %437, %438 : vector<1x4xf32>
    %440 = arith.index_cast %c5_i32 : i32 to index
    %c0_156 = arith.constant 0 : index
    %c0_157 = arith.constant 0 : index
    %441 = vector.load %arg5[%440, %c0_156, %c0_157] : memref<6x4x4xf32, #tpu.memory_space<vmem>>, vector<1x1x4xf32>
    %442 = vector.shape_cast %441 : vector<1x1x4xf32> to vector<1x4xf32>
    %443 = vector.shape_cast %436 : vector<1x4xf32> to vector<1x1x4xf32>
    tpu.vector_store %arg5[%440, %c0_156, %c0_157], %443 {strides = array<i32>} : memref<6x4x4xf32, #tpu.memory_space<vmem>>, vector<1x1x4xf32>,
    %444 = arith.index_cast %c5_i32 : i32 to index
    %c2_158 = arith.constant 2 : index
    %c0_159 = arith.constant 0 : index
    %445 = vector.load %arg5[%444, %c2_158, %c0_159] : memref<6x4x4xf32, #tpu.memory_space<vmem>>, vector<1x1x4xf32>
    %446 = vector.shape_cast %445 : vector<1x1x4xf32> to vector<1x4xf32>
    %447 = vector.shape_cast %439 : vector<1x4xf32> to vector<1x1x4xf32>
    tpu.vector_store %arg5[%444, %c2_158, %c0_159], %447 {strides = array<i32>} : memref<6x4x4xf32, #tpu.memory_space<vmem>>, vector<1x1x4xf32>,
    %448 = arith.index_cast %c5_i32 : i32 to index
    %c16_160 = arith.constant 16 : index
    %c0_161 = arith.constant 0 : index
    %449 = vector.load %arg2[%448, %c16_160, %c0_161] : memref<6x32x4xf32, #tpu.memory_space<vmem>>, vector<1x10x4xf32>
    %450 = vector.shape_cast %449 : vector<1x10x4xf32> to vector<10x4xf32>
    %451 = arith.index_cast %c5_i32 : i32 to index
    %c26_162 = arith.constant 26 : index
    %c0_163 = arith.constant 0 : index
    %452 = vector.load %arg2[%451, %c26_162, %c0_163] : memref<6x32x4xf32, #tpu.memory_space<vmem>>, vector<1x1x4xf32>
    %453 = vector.shape_cast %452 : vector<1x1x4xf32> to vector<1x4xf32>
    %454 = arith.index_cast %c5_i32 : i32 to index
    %c27_164 = arith.constant 27 : index
    %c0_165 = arith.constant 0 : index
    %455 = vector.load %arg2[%454, %c27_164, %c0_165] : memref<6x32x4xf32, #tpu.memory_space<vmem>>, vector<1x1x4xf32>
    %456 = vector.shape_cast %455 : vector<1x1x4xf32> to vector<1x4xf32>
    %457 = arith.index_cast %c5_i32 : i32 to index
    %c28_166 = arith.constant 28 : index
    %c0_167 = arith.constant 0 : index
    %458 = vector.load %arg2[%457, %c28_166, %c0_167] : memref<6x32x4xf32, #tpu.memory_space<vmem>>, vector<1x1x4xf32>
    %459 = vector.shape_cast %458 : vector<1x1x4xf32> to vector<1x4xf32>
    %460 = vector.broadcast %397 : vector<1x4xf32> to vector<10x4xf32>
    %461 = arith.mulf %460, %5 : vector<10x4xf32>
    %462 = arith.addf %450, %461 : vector<10x4xf32>
    %463 = vector.broadcast %400 : vector<1x4xf32> to vector<10x4xf32>
    %464 = arith.mulf %463, %8 : vector<10x4xf32>
    %465 = arith.addf %462, %464 : vector<10x4xf32>
    %466 = math.tanh %465 : vector<10x4xf32>
    %467 = arith.mulf %466, %11 : vector<10x4xf32>
    %cst_168 = arith.constant dense<0.000000e+00> : vector<4xf32>
    %468 = vector.multi_reduction <add>, %467, %cst_168 [0] : vector<10x4xf32> to vector<4xf32>
    %469 = vector.shape_cast %468 : vector<4xf32> to vector<1x4xf32>
    %470 = arith.mulf %466, %14 : vector<10x4xf32>
    %cst_169 = arith.constant dense<0.000000e+00> : vector<4xf32>
    %471 = vector.multi_reduction <add>, %470, %cst_169 [0] : vector<10x4xf32> to vector<4xf32>
    %472 = vector.shape_cast %471 : vector<4xf32> to vector<1x4xf32>
    %473 = arith.addf %397, %456 : vector<1x4xf32>
    %474 = arith.mulf %453, %469 : vector<1x4xf32>
    %475 = arith.addf %473, %474 : vector<1x4xf32>
    %476 = arith.addf %400, %459 : vector<1x4xf32>
    %477 = arith.mulf %453, %472 : vector<1x4xf32>
    %478 = arith.addf %476, %477 : vector<1x4xf32>
    %479 = arith.index_cast %c5_i32 : i32 to index
    %c1_170 = arith.constant 1 : index
    %c0_171 = arith.constant 0 : index
    %480 = vector.load %arg5[%479, %c1_170, %c0_171] : memref<6x4x4xf32, #tpu.memory_space<vmem>>, vector<1x1x4xf32>
    %481 = vector.shape_cast %480 : vector<1x1x4xf32> to vector<1x4xf32>
    %482 = vector.shape_cast %475 : vector<1x4xf32> to vector<1x1x4xf32>
    tpu.vector_store %arg5[%479, %c1_170, %c0_171], %482 {strides = array<i32>} : memref<6x4x4xf32, #tpu.memory_space<vmem>>, vector<1x1x4xf32>,
    %483 = arith.index_cast %c5_i32 : i32 to index
    %c3_172 = arith.constant 3 : index
    %c0_173 = arith.constant 0 : index
    %484 = vector.load %arg5[%483, %c3_172, %c0_173] : memref<6x4x4xf32, #tpu.memory_space<vmem>>, vector<1x1x4xf32>
    %485 = vector.shape_cast %484 : vector<1x1x4xf32> to vector<1x4xf32>
    %486 = vector.shape_cast %478 : vector<1x4xf32> to vector<1x1x4xf32>
    tpu.vector_store %arg5[%483, %c3_172, %c0_173], %486 {strides = array<i32>} : memref<6x4x4xf32, #tpu.memory_space<vmem>>, vector<1x1x4xf32>,
    %c6_i32 = arith.constant 6 : i32
    %c0_174 = arith.constant 0 : index
    %c0_175 = arith.constant 0 : index
    %487 = vector.load %arg6[%c0_174, %c0_175] : memref<4x4xf32, #tpu.memory_space<vmem>>, vector<1x4xf32>
    tpu.vector_store %arg6[%c0_174, %c0_175], %436 {strides = array<i32>} : memref<4x4xf32, #tpu.memory_space<vmem>>, vector<1x4xf32>,
    %c1_176 = arith.constant 1 : index
    %c0_177 = arith.constant 0 : index
    %488 = vector.load %arg6[%c1_176, %c0_177] : memref<4x4xf32, #tpu.memory_space<vmem>>, vector<1x4xf32>
    tpu.vector_store %arg6[%c1_176, %c0_177], %439 {strides = array<i32>} : memref<4x4xf32, #tpu.memory_space<vmem>>, vector<1x4xf32>,
    %c2_178 = arith.constant 2 : index
    %c0_179 = arith.constant 0 : index
    %489 = vector.load %arg6[%c2_178, %c0_179] : memref<4x4xf32, #tpu.memory_space<vmem>>, vector<1x4xf32>
    tpu.vector_store %arg6[%c2_178, %c0_179], %475 {strides = array<i32>} : memref<4x4xf32, #tpu.memory_space<vmem>>, vector<1x4xf32>,
    %c3_180 = arith.constant 3 : index
    %c0_181 = arith.constant 0 : index
    %490 = vector.load %arg6[%c3_180, %c0_181] : memref<4x4xf32, #tpu.memory_space<vmem>>, vector<1x4xf32>
    tpu.vector_store %arg6[%c3_180, %c0_181], %478 {strides = array<i32>} : memref<4x4xf32, #tpu.memory_space<vmem>>, vector<1x4xf32>,
    return
  }
  func.func @transform_0(%arg0: i32, %arg1: i32) -> (i32, i32, i32) {
    %c0_i32 = arith.constant 0 : i32
    %c0_i32_0 = arith.constant 0 : i32
    return %arg1, %c0_i32, %arg0 : i32, i32, i32
  }
  func.func @transform_1(%arg0: i32, %arg1: i32) -> (i32, i32) {
    %c0_i32 = arith.constant 0 : i32
    %c0_i32_0 = arith.constant 0 : i32
    return %c0_i32, %arg0 : i32, i32
  }
  func.func @transform_2(%arg0: i32, %arg1: i32) -> (i32, i32) {
    %c0_i32 = arith.constant 0 : i32
    %c0_i32_0 = arith.constant 0 : i32
    %c0_i32_1 = arith.constant 0 : i32
    return %c0_i32, %c0_i32_0 : i32, i32
  }
  func.func @transform_3(%arg0: i32, %arg1: i32) -> (i32, i32, i32) {
    %c0_i32 = arith.constant 0 : i32
    %c0_i32_0 = arith.constant 0 : i32
    return %arg1, %c0_i32, %arg0 : i32, i32, i32
  }
}

</mosaic_0001>

<llo_original>
// kernel: tpu_custom_call.1
$region0: #{tpu_custom_call.1}
  #allocation0 [shape = 'u32[]', space=smem, size = 0x4, offset = 0x4, fixed_abs, tag = 'smem constant byte address 0x4 - core index']
  #allocation1 [shape = 'u32[144,128]{1,0:T(1,128)}', space=vmem, size = 0x12000, scoped, tag = 'internal scratch']
  #allocation2 [shape = 'f32[4,4]{1,0:T(4,128)}', space=vmem, size = 0x800, scoped, tag = 'scratch operand']
  %s0 = inlined_call_operand.vmem [shape: f32[6,32,4], index: 0, kind: input, shape index: {}]
  %s1 = inlined_call_operand.vmem [shape: f32[4,4], index: 1, kind: input, shape index: {}]
  %s2 = inlined_call_operand.vmem [shape: f32[10,4], index: 2, kind: input, shape index: {}]
  %s3 = inlined_call_operand.vmem [shape: f32[6,4,4], index: 3, kind: output, shape index: {}]
  %s4 = sld [smem:[#allocation0]]
  $region26: #{tpu_custom_call.1} parent=0
    _
  %s6 = ssub.s32 1, %s4
  %s7 = scalar_select 0, %s6, %s4
  // Predicated region
  $region2: #{tpu_custom_call.1} parent=0 // pred_check
    _
  $region3: #{tpu_custom_call.1} parent=0 // pred_check_branch
    %9 = sbr.rel (0) target = $region5
  $region4: #{tpu_custom_call.1} parent=0 // pred_region
    _
  $region5: #{tpu_custom_call.1} parent=0 // pred_fallthru
    _
  // Predicated region
  $region6: #{tpu_custom_call.1} parent=0 // pred_check
    _
  $region7: #{tpu_custom_call.1} parent=0 // pred_check_branch
    %11 = sbr.rel (0) target = $region9
  $region8: #{tpu_custom_call.1} parent=0 // pred_region
    _
  $region9: #{tpu_custom_call.1} parent=0 // pred_fallthru
    _
  // Predicated region
  $region10: #{tpu_custom_call.1} parent=0 // pred_check
    _
  $region11: #{tpu_custom_call.1} parent=0 // pred_check_branch
    %13 = sbr.rel (0) target = $region13
  $region12: #{tpu_custom_call.1} parent=0 // pred_region
    _
  $region13: #{tpu_custom_call.1} parent=0 // pred_fallthru
    _
  %p14 = scmp.eq.s32.totalorder 0, 0
  // Predicated region
  $region14: #{tpu_custom_call.1} parent=0 // pred_check
    %p15 = pneg %p14
  $region15: #{tpu_custom_call.1} parent=0 // pred_check_branch
    %17 = sbr.rel (%p15) target = $region17
  $region16: #{tpu_custom_call.1} parent=0 // pred_region
    %v18 = vld [vmem:[%s1] sm:$0xf]
    %vm19 = vcmask 27648
    %20 = vst.msk [vmem:[#allocation2] sm:$0xf] %vm19, %v18
  $region17: #{tpu_custom_call.1} parent=0 // pred_fallthru
    _
  %v21 = vld [vmem:[%s2] sm:$0xff]
  %v22 = vld [vmem:[%s2 + $0x8] sm:$0x3]
  %24 = vset.pattern.permute.xlu0 0
  %25 = vperm.xlu0 %24, %v21
  %v26 = vpop.permute.xlu0 %25
  %29 = vset.pattern.permute.xlu0 0
  %30 = vperm.xlu0 %29, %v22
  %v31 = vpop.permute.xlu0 %30
  %33 = vset.pattern.permute.xlu0 1
  %34 = vperm.xlu0 %33, %v21
  %v35 = vpop.permute.xlu0 %34
  %37 = vset.pattern.permute.xlu0 1
  %38 = vperm.xlu0 %37, %v22
  %v39 = vpop.permute.xlu0 %38
  %41 = vset.pattern.permute.xlu0 2
  %42 = vperm.xlu0 %41, %v21
  %v43 = vpop.permute.xlu0 %42
  %45 = vset.pattern.permute.xlu0 2
  %46 = vperm.xlu0 %45, %v22
  %v47 = vpop.permute.xlu0 %46
  %49 = vset.pattern.permute.xlu0 3
  %50 = vperm.xlu0 %49, %v21
  %v51 = vpop.permute.xlu0 %50
  %53 = vset.pattern.permute.xlu0 3
  %54 = vperm.xlu0 %53, %v22
  %v55 = vpop.permute.xlu0 %54
  %v57 = vld [vmem:[#allocation2] sm:$0x1]
  %v58 = vld [vmem:[#allocation2 + $0x1] sm:$0x1]
  %v59 = vld [vmem:[#allocation2 + $0x2] sm:$0x1]
  %v60 = vld [vmem:[#allocation2 + $0x3] sm:$0x1]
  %v61 = vld [vmem:[%s0] sm:$0xff]
  %v62 = vld [vmem:[%s0 + $0x8] sm:$0x3]
  %v63 = vld [vmem:[%s0 + $0xa] sm:$0x1]
  %v64 = vld [vmem:[%s0 + $0xb] sm:$0x1]
  %v65 = vld [vmem:[%s0 + $0xc] sm:$0x1]
  %v66 = vlaneseq
  %v67 = vshrl.u32 %v66, 7
  %v68 = vsub.s32 0, %v67
  %v69 = vrot.slane %v57, %v68
  %v70 = vmul.f32 %v69, %v26
  %v71 = vmul.f32 %v69, %v31
  %v72 = vadd.f32 %v61, %v70
  %v73 = vadd.f32 %v62, %v71
  %v74 = vlaneseq
  %v75 = vshrl.u32 %v74, 7
  %v76 = vsub.s32 0, %v75
  %v77 = vrot.slane %v58, %v76
  %v78 = vmul.f32 %v77, %v35
  %v79 = vmul.f32 %v77, %v39
  %v80 = vadd.f32 %v72, %v78
  %v81 = vadd.f32 %v73, %v79
  %v82 = vtanh.pop %v80
  %v83 = vtanh.pop %v81
  %v84 = vmul.f32 %v82, %v43
  %v85 = vmul.f32 %v83, %v47
  %vm86 = vcmask 31744
  %v87 = vsel %vm86, %v84, 0.0
  %vm88 = vcmask 25600
  %v89 = vsel %vm88, %v85, 0.0
  %v90 = vadd.f32 %v87, %v89
  %v91 = vrot.slane %v90, 4
  %v92 = vadd.f32 %v90, %v91
  %v93 = vrot.slane %v92, 2
  %v94 = vadd.f32 %v92, %v93
  %v95 = vrot.slane %v94, 1
  %v96 = vadd.f32 %v94, %v95
  %v97 = vmul.f32 %v82, %v51
  %v98 = vmul.f32 %v83, %v55
  %v99 = vsel %vm86, %v97, 0.0
  %v100 = vsel %vm88, %v98, 0.0
  %v101 = vadd.f32 %v99, %v100
  %v102 = vrot.slane %v101, 4
  %v103 = vadd.f32 %v101, %v102
  %v104 = vrot.slane %v103, 2
  %v105 = vadd.f32 %v103, %v104
  %v106 = vrot.slane %v105, 1
  %v107 = vadd.f32 %v105, %v106
  %v108 = vadd.f32 %v57, %v64
  %v109 = vmul.f32 %v63, %v96
  %v110 = vadd.f32 %v108, %v109
  %v111 = vadd.f32 %v58, %v65
  %v112 = vmul.f32 %v63, %v107
  %v113 = vadd.f32 %v111, %v112
  %vm114 = vcmask 24576
  %115 = vst.msk [vmem:[%s3] sm:$0x1] %vm114, %v110
  %116 = vst.msk [vmem:[%s3 + $0x2] sm:$0x1] %vm114, %v113
  %v117 = vld [vmem:[%s0 + $0x10] sm:$0xff]
  %v118 = vld [vmem:[%s0 + $0x18] sm:$0x3]
  %v119 = vld [vmem:[%s0 + $0x1a] sm:$0x1]
  %v120 = vld [vmem:[%s0 + $0x1b] sm:$0x1]
  %v121 = vld [vmem:[%s0 + $0x1c] sm:$0x1]
  %v122 = vlaneseq
  %v123 = vshrl.u32 %v122, 7
  %v124 = vsub.s32 0, %v123
  %v125 = vrot.slane %v59, %v124
  %v126 = vmul.f32 %v125, %v26
  %v127 = vmul.f32 %v125, %v31
  %v128 = vadd.f32 %v117, %v126
  %v129 = vadd.f32 %v118, %v127
  %v130 = vlaneseq
  %v131 = vshrl.u32 %v130, 7
  %v132 = vsub.s32 0, %v131
  %v133 = vrot.slane %v60, %v132
  %v134 = vmul.f32 %v133, %v35
  %v135 = vmul.f32 %v133, %v39
  %v136 = vadd.f32 %v128, %v134
  %v137 = vadd.f32 %v129, %v135
  %v138 = vtanh.pop %v136
  %v139 = vtanh.pop %v137
  %v140 = vmul.f32 %v138, %v43
  %v141 = vmul.f32 %v139, %v47
  %v142 = vsel %vm86, %v140, 0.0
  %v143 = vsel %vm88, %v141, 0.0
  %v144 = vadd.f32 %v142, %v143
  %v145 = vrot.slane %v144, 4
  %v146 = vadd.f32 %v144, %v145
  %v147 = vrot.slane %v146, 2
  %v148 = vadd.f32 %v146, %v147
  %v149 = vrot.slane %v148, 1
  %v150 = vadd.f32 %v148, %v149
  %v151 = vmul.f32 %v138, %v51
  %v152 = vmul.f32 %v139, %v55
  %v153 = vsel %vm86, %v151, 0.0
  %v154 = vsel %vm88, %v152, 0.0
  %v155 = vadd.f32 %v153, %v154
  %v156 = vrot.slane %v155, 4
  %v157 = vadd.f32 %v155, %v156
  %v158 = vrot.slane %v157, 2
  %v159 = vadd.f32 %v157, %v158
  %v160 = vrot.slane %v159, 1
  %v161 = vadd.f32 %v159, %v160
  %v162 = vadd.f32 %v59, %v120
  %v163 = vmul.f32 %v119, %v150
  %v164 = vadd.f32 %v162, %v163
  %v165 = vadd.f32 %v60, %v121
  %v166 = vmul.f32 %v119, %v161
  %v167 = vadd.f32 %v165, %v166
  %168 = vst.msk [vmem:[%s3 + $0x1] sm:$0x1] %vm114, %v164
  %169 = vst.msk [vmem:[%s3 + $0x3] sm:$0x1] %vm114, %v167
  %s170 = scalar_lea.vmem %s0, 32
  %v171 = vld [vmem:[%s170] sm:$0xff]
  %v172 = vld [vmem:[%s170 + $0x8] sm:$0x3]
  %v173 = vld [vmem:[%s170 + $0xa] sm:$0x1]
  %v174 = vld [vmem:[%s170 + $0xb] sm:$0x1]
  %v175 = vld [vmem:[%s170 + $0xc] sm:$0x1]
  %v176 = vlaneseq
  %v177 = vshrl.u32 %v176, 7
  %v178 = vsub.s32 0, %v177
  %v179 = vrot.slane %v110, %v178
  %v180 = vmul.f32 %v179, %v26
  %v181 = vmul.f32 %v179, %v31
  %v182 = vadd.f32 %v171, %v180
  %v183 = vadd.f32 %v172, %v181
  %v184 = vlaneseq
  %v185 = vshrl.u32 %v184, 7
  %v186 = vsub.s32 0, %v185
  %v187 = vrot.slane %v113, %v186
  %v188 = vmul.f32 %v187, %v35
  %v189 = vmul.f32 %v187, %v39
  %v190 = vadd.f32 %v182, %v188
  %v191 = vadd.f32 %v183, %v189
  %v192 = vtanh.pop %v190
  %v193 = vtanh.pop %v191
  %v194 = vmul.f32 %v192, %v43
  %v195 = vmul.f32 %v193, %v47
  %v196 = vsel %vm86, %v194, 0.0
  %v197 = vsel %vm88, %v195, 0.0
  %v198 = vadd.f32 %v196, %v197
  %v199 = vrot.slane %v198, 4
  %v200 = vadd.f32 %v198, %v199
  %v201 = vrot.slane %v200, 2
  %v202 = vadd.f32 %v200, %v201
  %v203 = vrot.slane %v202, 1
  %v204 = vadd.f32 %v202, %v203
  %v205 = vmul.f32 %v192, %v51
  %v206 = vmul.f32 %v193, %v55
  %v207 = vsel %vm86, %v205, 0.0
  %v208 = vsel %vm88, %v206, 0.0
  %v209 = vadd.f32 %v207, %v208
  %v210 = vrot.slane %v209, 4
  %v211 = vadd.f32 %v209, %v210
  %v212 = vrot.slane %v211, 2
  %v213 = vadd.f32 %v211, %v212
  %v214 = vrot.slane %v213, 1
  %v215 = vadd.f32 %v213, %v214
  %v216 = vadd.f32 %v110, %v174
  %v217 = vmul.f32 %v173, %v204
  %v218 = vadd.f32 %v216, %v217
  %v219 = vadd.f32 %v113, %v175
  %v220 = vmul.f32 %v173, %v215
  %v221 = vadd.f32 %v219, %v220
  %s222 = scalar_lea.vmem %s3, 4
  %223 = vst.msk [vmem:[%s222] sm:$0x1] %vm114, %v218
  %224 = vst.msk [vmem:[%s222 + $0x2] sm:$0x1] %vm114, %v221
  %v225 = vld [vmem:[%s170 + $0x10] sm:$0xff]
  %v226 = vld [vmem:[%s170 + $0x18] sm:$0x3]
  %v227 = vld [vmem:[%s170 + $0x1a] sm:$0x1]
  %v228 = vld [vmem:[%s170 + $0x1b] sm:$0x1]
  %v229 = vld [vmem:[%s170 + $0x1c] sm:$0x1]
  %v230 = vlaneseq
  %v231 = vshrl.u32 %v230, 7
  %v232 = vsub.s32 0, %v231
  %v233 = vrot.slane %v164, %v232
  %v234 = vmul.f32 %v233, %v26
  %v235 = vmul.f32 %v233, %v31
  %v236 = vadd.f32 %v225, %v234
  %v237 = vadd.f32 %v226, %v235
  %v238 = vlaneseq
  %v239 = vshrl.u32 %v238, 7
  %v240 = vsub.s32 0, %v239
  %v241 = vrot.slane %v167, %v240
  %v242 = vmul.f32 %v241, %v35
  %v243 = vmul.f32 %v241, %v39
  %v244 = vadd.f32 %v236, %v242
  %v245 = vadd.f32 %v237, %v243
  %v246 = vtanh.pop %v244
  %v247 = vtanh.pop %v245
  %v248 = vmul.f32 %v246, %v43
  %v249 = vmul.f32 %v247, %v47
  %v250 = vsel %vm86, %v248, 0.0
  %v251 = vsel %vm88, %v249, 0.0
  %v252 = vadd.f32 %v250, %v251
  %v253 = vrot.slane %v252, 4
  %v254 = vadd.f32 %v252, %v253
  %v255 = vrot.slane %v254, 2
  %v256 = vadd.f32 %v254, %v255
  %v257 = vrot.slane %v256, 1
  %v258 = vadd.f32 %v256, %v257
  %v259 = vmul.f32 %v246, %v51
  %v260 = vmul.f32 %v247, %v55
  %v261 = vsel %vm86, %v259, 0.0
  %v262 = vsel %vm88, %v260, 0.0
  %v263 = vadd.f32 %v261, %v262
  %v264 = vrot.slane %v263, 4
  %v265 = vadd.f32 %v263, %v264
  %v266 = vrot.slane %v265, 2
  %v267 = vadd.f32 %v265, %v266
  %v268 = vrot.slane %v267, 1
  %v269 = vadd.f32 %v267, %v268
  %v270 = vadd.f32 %v164, %v228
  %v271 = vmul.f32 %v227, %v258
  %v272 = vadd.f32 %v270, %v271
  %v273 = vadd.f32 %v167, %v229
  %v274 = vmul.f32 %v227, %v269
  %v275 = vadd.f32 %v273, %v274
  %276 = vst.msk [vmem:[%s222 + $0x1] sm:$0x1] %vm114, %v272
  %277 = vst.msk [vmem:[%s222 + $0x3] sm:$0x1] %vm114, %v275
  %s278 = scalar_lea.vmem %s0, 64
  %v279 = vld [vmem:[%s278] sm:$0xff]
  %v280 = vld [vmem:[%s278 + $0x8] sm:$0x3]
  %v281 = vld [vmem:[%s278 + $0xa] sm:$0x1]
  %v282 = vld [vmem:[%s278 + $0xb] sm:$0x1]
  %v283 = vld [vmem:[%s278 + $0xc] sm:$0x1]
  %v284 = vlaneseq
  %v285 = vshrl.u32 %v284, 7
  %v286 = vsub.s32 0, %v285
  %v287 = vrot.slane %v218, %v286
  %v288 = vmul.f32 %v287, %v26
  %v289 = vmul.f32 %v287, %v31
  %v290 = vadd.f32 %v279, %v288
  %v291 = vadd.f32 %v280, %v289
  %v292 = vlaneseq
  %v293 = vshrl.u32 %v292, 7
  %v294 = vsub.s32 0, %v293
  %v295 = vrot.slane %v221, %v294
  %v296 = vmul.f32 %v295, %v35
  %v297 = vmul.f32 %v295, %v39
  %v298 = vadd.f32 %v290, %v296
  %v299 = vadd.f32 %v291, %v297
  %v300 = vtanh.pop %v298
  %v301 = vtanh.pop %v299
  %v302 = vmul.f32 %v300, %v43
  %v303 = vmul.f32 %v301, %v47
  %v304 = vsel %vm86, %v302, 0.0
  %v305 = vsel %vm88, %v303, 0.0
  %v306 = vadd.f32 %v304, %v305
  %v307 = vrot.slane %v306, 4
  %v308 = vadd.f32 %v306, %v307
  %v309 = vrot.slane %v308, 2
  %v310 = vadd.f32 %v308, %v309
  %v311 = vrot.slane %v310, 1
  %v312 = vadd.f32 %v310, %v311
  %v313 = vmul.f32 %v300, %v51
  %v314 = vmul.f32 %v301, %v55
  %v315 = vsel %vm86, %v313, 0.0
  %v316 = vsel %vm88, %v314, 0.0
  %v317 = vadd.f32 %v315, %v316
  %v318 = vrot.slane %v317, 4
  %v319 = vadd.f32 %v317, %v318
  %v320 = vrot.slane %v319, 2
  %v321 = vadd.f32 %v319, %v320
  %v322 = vrot.slane %v321, 1
  %v323 = vadd.f32 %v321, %v322
  %v324 = vadd.f32 %v218, %v282
  %v325 = vmul.f32 %v281, %v312
  %v326 = vadd.f32 %v324, %v325
  %v327 = vadd.f32 %v221, %v283
  %v328 = vmul.f32 %v281, %v323
  %v329 = vadd.f32 %v327, %v328
  %s330 = scalar_lea.vmem %s3, 8
  %331 = vst.msk [vmem:[%s330] sm:$0x1] %vm114, %v326
  %332 = vst.msk [vmem:[%s330 + $0x2] sm:$0x1] %vm114, %v329
  %v333 = vld [vmem:[%s278 + $0x10] sm:$0xff]
  %v334 = vld [vmem:[%s278 + $0x18] sm:$0x3]
  %v335 = vld [vmem:[%s278 + $0x1a] sm:$0x1]
  %v336 = vld [vmem:[%s278 + $0x1b] sm:$0x1]
  %v337 = vld [vmem:[%s278 + $0x1c] sm:$0x1]
  %v338 = vlaneseq
  %v339 = vshrl.u32 %v338, 7
  %v340 = vsub.s32 0, %v339
  %v341 = vrot.slane %v272, %v340
  %v342 = vmul.f32 %v341, %v26
  %v343 = vmul.f32 %v341, %v31
  %v344 = vadd.f32 %v333, %v342
  %v345 = vadd.f32 %v334, %v343
  %v346 = vlaneseq
  %v347 = vshrl.u32 %v346, 7
  %v348 = vsub.s32 0, %v347
  %v349 = vrot.slane %v275, %v348
  %v350 = vmul.f32 %v349, %v35
  %v351 = vmul.f32 %v349, %v39
  %v352 = vadd.f32 %v344, %v350
  %v353 = vadd.f32 %v345, %v351
  %v354 = vtanh.pop %v352
  %v355 = vtanh.pop %v353
  %v356 = vmul.f32 %v354, %v43
  %v357 = vmul.f32 %v355, %v47
  %v358 = vsel %vm86, %v356, 0.0
  %v359 = vsel %vm88, %v357, 0.0
  %v360 = vadd.f32 %v358, %v359
  %v361 = vrot.slane %v360, 4
  %v362 = vadd.f32 %v360, %v361
  %v363 = vrot.slane %v362, 2
  %v364 = vadd.f32 %v362, %v363
  %v365 = vrot.slane %v364, 1
  %v366 = vadd.f32 %v364, %v365
  %v367 = vmul.f32 %v354, %v51
  %v368 = vmul.f32 %v355, %v55
  %v369 = vsel %vm86, %v367, 0.0
  %v370 = vsel %vm88, %v368, 0.0
  %v371 = vadd.f32 %v369, %v370
  %v372 = vrot.slane %v371, 4
  %v373 = vadd.f32 %v371, %v372
  %v374 = vrot.slane %v373, 2
  %v375 = vadd.f32 %v373, %v374
  %v376 = vrot.slane %v375, 1
  %v377 = vadd.f32 %v375, %v376
  %v378 = vadd.f32 %v272, %v336
  %v379 = vmul.f32 %v335, %v366
  %v380 = vadd.f32 %v378, %v379
  %v381 = vadd.f32 %v275, %v337
  %v382 = vmul.f32 %v335, %v377
  %v383 = vadd.f32 %v381, %v382
  %384 = vst.msk [vmem:[%s330 + $0x1] sm:$0x1] %vm114, %v380
  %385 = vst.msk [vmem:[%s330 + $0x3] sm:$0x1] %vm114, %v383
  %s386 = scalar_lea.vmem %s0, 96
  %v387 = vld [vmem:[%s386] sm:$0xff]
  %v388 = vld [vmem:[%s386 + $0x8] sm:$0x3]
  %v389 = vld [vmem:[%s386 + $0xa] sm:$0x1]
  %v390 = vld [vmem:[%s386 + $0xb] sm:$0x1]
  %v391 = vld [vmem:[%s386 + $0xc] sm:$0x1]
  %v392 = vlaneseq
  %v393 = vshrl.u32 %v392, 7
  %v394 = vsub.s32 0, %v393
  %v395 = vrot.slane %v326, %v394
  %v396 = vmul.f32 %v395, %v26
  %v397 = vmul.f32 %v395, %v31
  %v398 = vadd.f32 %v387, %v396
  %v399 = vadd.f32 %v388, %v397
  %v400 = vlaneseq
  %v401 = vshrl.u32 %v400, 7
  %v402 = vsub.s32 0, %v401
  %v403 = vrot.slane %v329, %v402
  %v404 = vmul.f32 %v403, %v35
  %v405 = vmul.f32 %v403, %v39
  %v406 = vadd.f32 %v398, %v404
  %v407 = vadd.f32 %v399, %v405
  %v408 = vtanh.pop %v406
  %v409 = vtanh.pop %v407
  %v410 = vmul.f32 %v408, %v43
  %v411 = vmul.f32 %v409, %v47
  %v412 = vsel %vm86, %v410, 0.0
  %v413 = vsel %vm88, %v411, 0.0
  %v414 = vadd.f32 %v412, %v413
  %v415 = vrot.slane %v414, 4
  %v416 = vadd.f32 %v414, %v415
  %v417 = vrot.slane %v416, 2
  %v418 = vadd.f32 %v416, %v417
  %v419 = vrot.slane %v418, 1
  %v420 = vadd.f32 %v418, %v419
  %v421 = vmul.f32 %v408, %v51
  %v422 = vmul.f32 %v409, %v55
  %v423 = vsel %vm86, %v421, 0.0
  %v424 = vsel %vm88, %v422, 0.0
  %v425 = vadd.f32 %v423, %v424
  %v426 = vrot.slane %v425, 4
  %v427 = vadd.f32 %v425, %v426
  %v428 = vrot.slane %v427, 2
  %v429 = vadd.f32 %v427, %v428
  %v430 = vrot.slane %v429, 1
  %v431 = vadd.f32 %v429, %v430
  %v432 = vadd.f32 %v326, %v390
  %v433 = vmul.f32 %v389, %v420
  %v434 = vadd.f32 %v432, %v433
  %v435 = vadd.f32 %v329, %v391
  %v436 = vmul.f32 %v389, %v431
  %v437 = vadd.f32 %v435, %v436
  %s438 = scalar_lea.vmem %s3, 12
  %439 = vst.msk [vmem:[%s438] sm:$0x1] %vm114, %v434
  %440 = vst.msk [vmem:[%s438 + $0x2] sm:$0x1] %vm114, %v437
  %v441 = vld [vmem:[%s386 + $0x10] sm:$0xff]
  %v442 = vld [vmem:[%s386 + $0x18] sm:$0x3]
  %v443 = vld [vmem:[%s386 + $0x1a] sm:$0x1]
  %v444 = vld [vmem:[%s386 + $0x1b] sm:$0x1]
  %v445 = vld [vmem:[%s386 + $0x1c] sm:$0x1]
  %v446 = vlaneseq
  %v447 = vshrl.u32 %v446, 7
  %v448 = vsub.s32 0, %v447
  %v449 = vrot.slane %v380, %v448
  %v450 = vmul.f32 %v449, %v26
  %v451 = vmul.f32 %v449, %v31
  %v452 = vadd.f32 %v441, %v450
  %v453 = vadd.f32 %v442, %v451
  %v454 = vlaneseq
  %v455 = vshrl.u32 %v454, 7
  %v456 = vsub.s32 0, %v455
  %v457 = vrot.slane %v383, %v456
  %v458 = vmul.f32 %v457, %v35
  %v459 = vmul.f32 %v457, %v39
  %v460 = vadd.f32 %v452, %v458
  %v461 = vadd.f32 %v453, %v459
  %v462 = vtanh.pop %v460
  %v463 = vtanh.pop %v461
  %v464 = vmul.f32 %v462, %v43
  %v465 = vmul.f32 %v463, %v47
  %v466 = vsel %vm86, %v464, 0.0
  %v467 = vsel %vm88, %v465, 0.0
  %v468 = vadd.f32 %v466, %v467
  %v469 = vrot.slane %v468, 4
  %v470 = vadd.f32 %v468, %v469
  %v471 = vrot.slane %v470, 2
  %v472 = vadd.f32 %v470, %v471
  %v473 = vrot.slane %v472, 1
  %v474 = vadd.f32 %v472, %v473
  %v475 = vmul.f32 %v462, %v51
  %v476 = vmul.f32 %v463, %v55
  %v477 = vsel %vm86, %v475, 0.0
  %v478 = vsel %vm88, %v476, 0.0
  %v479 = vadd.f32 %v477, %v478
  %v480 = vrot.slane %v479, 4
  %v481 = vadd.f32 %v479, %v480
  %v482 = vrot.slane %v481, 2
  %v483 = vadd.f32 %v481, %v482
  %v484 = vrot.slane %v483, 1
  %v485 = vadd.f32 %v483, %v484
  %v486 = vadd.f32 %v380, %v444
  %v487 = vmul.f32 %v443, %v474
  %v488 = vadd.f32 %v486, %v487
  %v489 = vadd.f32 %v383, %v445
  %v490 = vmul.f32 %v443, %v485
  %v491 = vadd.f32 %v489, %v490
  %492 = vst.msk [vmem:[%s438 + $0x1] sm:$0x1] %vm114, %v488
  %493 = vst.msk [vmem:[%s438 + $0x3] sm:$0x1] %vm114, %v491
  %s494 = scalar_lea.vmem %s0, 128
  %v495 = vld [vmem:[%s494] sm:$0xff]
  %v496 = vld [vmem:[%s494 + $0x8] sm:$0x3]
  %v497 = vld [vmem:[%s494 + $0xa] sm:$0x1]
  %v498 = vld [vmem:[%s494 + $0xb] sm:$0x1]
  %v499 = vld [vmem:[%s494 + $0xc] sm:$0x1]
  %v500 = vlaneseq
  %v501 = vshrl.u32 %v500, 7
  %v502 = vsub.s32 0, %v501
  %v503 = vrot.slane %v434, %v502
  %v504 = vmul.f32 %v503, %v26
  %v505 = vmul.f32 %v503, %v31
  %v506 = vadd.f32 %v495, %v504
  %v507 = vadd.f32 %v496, %v505
  %v508 = vlaneseq
  %v509 = vshrl.u32 %v508, 7
  %v510 = vsub.s32 0, %v509
  %v511 = vrot.slane %v437, %v510
  %v512 = vmul.f32 %v511, %v35
  %v513 = vmul.f32 %v511, %v39
  %v514 = vadd.f32 %v506, %v512
  %v515 = vadd.f32 %v507, %v513
  %v516 = vtanh.pop %v514
  %v517 = vtanh.pop %v515
  %v518 = vmul.f32 %v516, %v43
  %v519 = vmul.f32 %v517, %v47
  %v520 = vsel %vm86, %v518, 0.0
  %v521 = vsel %vm88, %v519, 0.0
  %v522 = vadd.f32 %v520, %v521
  %v523 = vrot.slane %v522, 4
  %v524 = vadd.f32 %v522, %v523
  %v525 = vrot.slane %v524, 2
  %v526 = vadd.f32 %v524, %v525
  %v527 = vrot.slane %v526, 1
  %v528 = vadd.f32 %v526, %v527
  %v529 = vmul.f32 %v516, %v51
  %v530 = vmul.f32 %v517, %v55
  %v531 = vsel %vm86, %v529, 0.0
  %v532 = vsel %vm88, %v530, 0.0
  %v533 = vadd.f32 %v531, %v532
  %v534 = vrot.slane %v533, 4
  %v535 = vadd.f32 %v533, %v534
  %v536 = vrot.slane %v535, 2
  %v537 = vadd.f32 %v535, %v536
  %v538 = vrot.slane %v537, 1
  %v539 = vadd.f32 %v537, %v538
  %v540 = vadd.f32 %v434, %v498
  %v541 = vmul.f32 %v497, %v528
  %v542 = vadd.f32 %v540, %v541
  %v543 = vadd.f32 %v437, %v499
  %v544 = vmul.f32 %v497, %v539
  %v545 = vadd.f32 %v543, %v544
  %s546 = scalar_lea.vmem %s3, 16
  %547 = vst.msk [vmem:[%s546] sm:$0x1] %vm114, %v542
  %548 = vst.msk [vmem:[%s546 + $0x2] sm:$0x1] %vm114, %v545
  %v549 = vld [vmem:[%s494 + $0x10] sm:$0xff]
  %v550 = vld [vmem:[%s494 + $0x18] sm:$0x3]
  %v551 = vld [vmem:[%s494 + $0x1a] sm:$0x1]
  %v552 = vld [vmem:[%s494 + $0x1b] sm:$0x1]
  %v553 = vld [vmem:[%s494 + $0x1c] sm:$0x1]
  %v554 = vlaneseq
  %v555 = vshrl.u32 %v554, 7
  %v556 = vsub.s32 0, %v555
  %v557 = vrot.slane %v488, %v556
  %v558 = vmul.f32 %v557, %v26
  %v559 = vmul.f32 %v557, %v31
  %v560 = vadd.f32 %v549, %v558
  %v561 = vadd.f32 %v550, %v559
  %v562 = vlaneseq
  %v563 = vshrl.u32 %v562, 7
  %v564 = vsub.s32 0, %v563
  %v565 = vrot.slane %v491, %v564
  %v566 = vmul.f32 %v565, %v35
  %v567 = vmul.f32 %v565, %v39
  %v568 = vadd.f32 %v560, %v566
  %v569 = vadd.f32 %v561, %v567
  %v570 = vtanh.pop %v568
  %v571 = vtanh.pop %v569
  %v572 = vmul.f32 %v570, %v43
  %v573 = vmul.f32 %v571, %v47
  %v574 = vsel %vm86, %v572, 0.0
  %v575 = vsel %vm88, %v573, 0.0
  %v576 = vadd.f32 %v574, %v575
  %v577 = vrot.slane %v576, 4
  %v578 = vadd.f32 %v576, %v577
  %v579 = vrot.slane %v578, 2
  %v580 = vadd.f32 %v578, %v579
  %v581 = vrot.slane %v580, 1
  %v582 = vadd.f32 %v580, %v581
  %v583 = vmul.f32 %v570, %v51
  %v584 = vmul.f32 %v571, %v55
  %v585 = vsel %vm86, %v583, 0.0
  %v586 = vsel %vm88, %v584, 0.0
  %v587 = vadd.f32 %v585, %v586
  %v588 = vrot.slane %v587, 4
  %v589 = vadd.f32 %v587, %v588
  %v590 = vrot.slane %v589, 2
  %v591 = vadd.f32 %v589, %v590
  %v592 = vrot.slane %v591, 1
  %v593 = vadd.f32 %v591, %v592
  %v594 = vadd.f32 %v488, %v552
  %v595 = vmul.f32 %v551, %v582
  %v596 = vadd.f32 %v594, %v595
  %v597 = vadd.f32 %v491, %v553
  %v598 = vmul.f32 %v551, %v593
  %v599 = vadd.f32 %v597, %v598
  %600 = vst.msk [vmem:[%s546 + $0x1] sm:$0x1] %vm114, %v596
  %601 = vst.msk [vmem:[%s546 + $0x3] sm:$0x1] %vm114, %v599
  %s602 = scalar_lea.vmem %s0, 160
  %v603 = vld [vmem:[%s602] sm:$0xff]
  %v604 = vld [vmem:[%s602 + $0x8] sm:$0x3]
  %v605 = vld [vmem:[%s602 + $0xa] sm:$0x1]
  %v606 = vld [vmem:[%s602 + $0xb] sm:$0x1]
  %v607 = vld [vmem:[%s602 + $0xc] sm:$0x1]
  %v608 = vlaneseq
  %v609 = vshrl.u32 %v608, 7
  %v610 = vsub.s32 0, %v609
  %v611 = vrot.slane %v542, %v610
  %v612 = vmul.f32 %v611, %v26
  %v613 = vmul.f32 %v611, %v31
  %v614 = vadd.f32 %v603, %v612
  %v615 = vadd.f32 %v604, %v613
  %v616 = vlaneseq
  %v617 = vshrl.u32 %v616, 7
  %v618 = vsub.s32 0, %v617
  %v619 = vrot.slane %v545, %v618
  %v620 = vmul.f32 %v619, %v35
  %v621 = vmul.f32 %v619, %v39
  %v622 = vadd.f32 %v614, %v620
  %v623 = vadd.f32 %v615, %v621
  %v624 = vtanh.pop %v622
  %v625 = vtanh.pop %v623
  %v626 = vmul.f32 %v624, %v43
  %v627 = vmul.f32 %v625, %v47
  %v628 = vsel %vm86, %v626, 0.0
  %v629 = vsel %vm88, %v627, 0.0
  %v630 = vadd.f32 %v628, %v629
  %v631 = vrot.slane %v630, 4
  %v632 = vadd.f32 %v630, %v631
  %v633 = vrot.slane %v632, 2
  %v634 = vadd.f32 %v632, %v633
  %v635 = vrot.slane %v634, 1
  %v636 = vadd.f32 %v634, %v635
  %v637 = vmul.f32 %v624, %v51
  %v638 = vmul.f32 %v625, %v55
  %v639 = vsel %vm86, %v637, 0.0
  %v640 = vsel %vm88, %v638, 0.0
  %v641 = vadd.f32 %v639, %v640
  %v642 = vrot.slane %v641, 4
  %v643 = vadd.f32 %v641, %v642
  %v644 = vrot.slane %v643, 2
  %v645 = vadd.f32 %v643, %v644
  %v646 = vrot.slane %v645, 1
  %v647 = vadd.f32 %v645, %v646
  %v648 = vadd.f32 %v542, %v606
  %v649 = vmul.f32 %v605, %v636
  %v650 = vadd.f32 %v648, %v649
  %v651 = vadd.f32 %v545, %v607
  %v652 = vmul.f32 %v605, %v647
  %v653 = vadd.f32 %v651, %v652
  %s654 = scalar_lea.vmem %s3, 20
  %655 = vst.msk [vmem:[%s654] sm:$0x1] %vm114, %v650
  %656 = vst.msk [vmem:[%s654 + $0x2] sm:$0x1] %vm114, %v653
  %v657 = vld [vmem:[%s602 + $0x10] sm:$0xff]
  %v658 = vld [vmem:[%s602 + $0x18] sm:$0x3]
  %v659 = vld [vmem:[%s602 + $0x1a] sm:$0x1]
  %v660 = vld [vmem:[%s602 + $0x1b] sm:$0x1]
  %v661 = vld [vmem:[%s602 + $0x1c] sm:$0x1]
  %v662 = vlaneseq
  %v663 = vshrl.u32 %v662, 7
  %v664 = vsub.s32 0, %v663
  %v665 = vrot.slane %v596, %v664
  %v666 = vmul.f32 %v665, %v26
  %v667 = vmul.f32 %v665, %v31
  %v668 = vadd.f32 %v657, %v666
  %v669 = vadd.f32 %v658, %v667
  %v670 = vlaneseq
  %v671 = vshrl.u32 %v670, 7
  %v672 = vsub.s32 0, %v671
  %v673 = vrot.slane %v599, %v672
  %v674 = vmul.f32 %v673, %v35
  %v675 = vmul.f32 %v673, %v39
  %v676 = vadd.f32 %v668, %v674
  %v677 = vadd.f32 %v669, %v675
  %v678 = vtanh.pop %v676
  %v679 = vtanh.pop %v677
  %v680 = vmul.f32 %v678, %v43
  %v681 = vmul.f32 %v679, %v47
  %v682 = vsel %vm86, %v680, 0.0
  %v683 = vsel %vm88, %v681, 0.0
  %v684 = vadd.f32 %v682, %v683
  %v685 = vrot.slane %v684, 4
  %v686 = vadd.f32 %v684, %v685
  %v687 = vrot.slane %v686, 2
  %v688 = vadd.f32 %v686, %v687
  %v689 = vrot.slane %v688, 1
  %v690 = vadd.f32 %v688, %v689
  %v691 = vmul.f32 %v678, %v51
  %v692 = vmul.f32 %v679, %v55
  %v693 = vsel %vm86, %v691, 0.0
  %v694 = vsel %vm88, %v692, 0.0
  %v695 = vadd.f32 %v693, %v694
  %v696 = vrot.slane %v695, 4
  %v697 = vadd.f32 %v695, %v696
  %v698 = vrot.slane %v697, 2
  %v699 = vadd.f32 %v697, %v698
  %v700 = vrot.slane %v699, 1
  %v701 = vadd.f32 %v699, %v700
  %v702 = vadd.f32 %v596, %v660
  %v703 = vmul.f32 %v659, %v690
  %v704 = vadd.f32 %v702, %v703
  %v705 = vadd.f32 %v599, %v661
  %v706 = vmul.f32 %v659, %v701
  %v707 = vadd.f32 %v705, %v706
  %708 = vst.msk [vmem:[%s654 + $0x1] sm:$0x1] %vm114, %v704
  %709 = vst.msk [vmem:[%s654 + $0x3] sm:$0x1] %vm114, %v707
  %710 = vst.msk [vmem:[#allocation2] sm:$0x1] %vm114, %v650
  %711 = vst.msk [vmem:[#allocation2 + $0x1] sm:$0x1] %vm114, %v653
  %712 = vst.msk [vmem:[#allocation2 + $0x2] sm:$0x1] %vm114, %v704
  %713 = vst.msk [vmem:[#allocation2 + $0x3] sm:$0x1] %vm114, %v707
  // Predicated region
  $region18: #{tpu_custom_call.1} parent=0 // pred_check
    _
  $region19: #{tpu_custom_call.1} parent=0 // pred_check_branch
    %715 = sbr.rel (0) target = $region21
  $region20: #{tpu_custom_call.1} parent=0 // pred_region
    _
  $region21: #{tpu_custom_call.1} parent=0 // pred_fallthru
    _
  // Predicated region
  $region22: #{tpu_custom_call.1} parent=0 // pred_check
    _
  $region23: #{tpu_custom_call.1} parent=0 // pred_check_branch
    %717 = sbr.rel (0) target = $region25
  $region24: #{tpu_custom_call.1} parent=0 // pred_region
    _
  $region25: #{tpu_custom_call.1} parent=0 // pred_fallthru
    _

</llo_original>
